<compile_context>
chip_gen: v6e
topology: v6e:2x2x1
jax: 0.10.0
libtpu: 0.0.40
codegen_flags: <defaults>
</compile_context>

<pallas_src>
import math

import jax
import jax.numpy as jnp
from jax.experimental import pallas as pl
from jax.experimental.pallas import tpu as pltpu


def _round_up(a, b):
    return (a + b - 1) // b * b


def _vmem_capacity_bytes():
    """Physical VMEM per TensorCore (128 MiB v5e/v6e, 64 MiB v7x)."""
    try:
        info = pltpu.get_tpu_info()
        cap = getattr(info, "vmem_capacity_bytes", None)
        if cap:
            return int(cap)
    except Exception:
        pass
    return 64 << 20  # conservative default (v7x)


def _pick_k_tile(n_cols_p, f_z, budget, max_k):
    """Contraction tile over adj columns: multiple of 256, divides padded N."""
    for tk in (2048, 1792, 1536, 1280, 1024, 768, 512, 256):
        if tk > max_k or n_cols_p % tk:
            continue
        # double-buffered adj (assume tm<=512) + z blocks, bf16
        if 2 * (512 * tk + tk * f_z) * 2 <= budget:
            return tk
    return 256  # n_cols_p is always a multiple of 256


def _pick_row_tile(n, tk, f_z, f_in_p, f_out_p, budget, max_rows, use_axw):
    """Row tile height: prefer 512/256, never below 128 (full MXU height)."""
    n_rows_min = _round_up(n, 128)
    chosen = 128
    for tm in (512, 256, 128):
        if tm > max_rows:
            continue
        est = (2 * tm * tk * 2            # adj blocks (double buffered, bf16)
               + 2 * tk * f_z * 2         # x / support blocks (bf16)
               + 2 * tm * f_out_p * 4)    # output blocks (f32)
        if use_axw:
            # f32 accumulator scratch + bf16 copy + second-matmul f32 temp
            est += tm * f_in_p * 6 + tm * f_out_p * 4
        if est <= budget:
            chosen = tm
            break
    return min(chosen, n_rows_min)


def _gcn_axw_kernel(adj_ref, x_ref, w_ref, b_ref, o_ref, acc_ref):
    """Path A: out_tile = (adj_tile @ x) @ w + bias, K-tiled over adj columns."""
    k = pl.program_id(1)

    @pl.when(k == 0)
    def _():
        acc_ref[...] = jnp.zeros_like(acc_ref)

    acc_ref[...] += jnp.dot(adj_ref[...], x_ref[...],
                            preferred_element_type=jnp.float32)

    @pl.when(k == pl.num_programs(1) - 1)
    def _():
        # TODO(synk): the intermediate is cast to bf16 for the second MXU
        # matmul; keep it in f32 if tighter parity with torch's f32 spmm is
        # required (at ~3x MXU cost for this small matmul).
        out = jnp.dot(acc_ref[...].astype(w_ref.dtype), w_ref[...],
                      preferred_element_type=jnp.float32)
        o_ref[...] = (out + b_ref[...]).astype(o_ref.dtype)


def _gcn_spmm_kernel(adj_ref, s_ref, b_ref, o_ref):
    """Path B: out_tile = adj_tile @ support + bias, accumulated in f32 in o_ref."""
    k = pl.program_id(1)

    @pl.when(k == 0)
    def _():
        o_ref[...] = jnp.broadcast_to(b_ref[...], o_ref.shape).astype(o_ref.dtype)

    o_ref[...] += jnp.dot(adj_ref[...], s_ref[...],
                          preferred_element_type=jnp.float32)


def graph_convolution(x, adj, weight, bias=None, *,
                      max_rows_per_tile=None, max_k_per_tile=None):
    """Pallas GCN forward: adj @ (x @ weight) + bias (dense adj == torch.spmm)."""
    n, f_in = x.shape
    f_in_w, f_out = weight.shape
    assert f_in_w == f_in and adj.shape == (n, n)

    cap = _vmem_capacity_bytes()
    budget = cap // 4  # tile-picking budget: ~16 MiB on v7x, ~32 MiB on v5e/v6e

    # Feature padding: lane-dense output (F_out -> mult of 128) and MXU-aligned
    # contraction (F_in -> mult of 128).  Padding with zeros is a no-op.
    f_in_p = _round_up(f_in, 128)
    f_out_p = _round_up(f_out, 128)

    # Associativity decided on the padded/executed sizes, not raw f_in/f_out.
    use_axw = f_in_p <= f_out_p
    f_z = f_in_p if use_axw else f_out_p  # width of the streamed contraction operand

    max_rows = max(128, int(max_rows_per_tile)) if max_rows_per_tile else 1 << 30
    max_k = max(256, int(max_k_per_tile)) if max_k_per_tile else 1 << 30

    # adj column / contraction padding (256 multiples: matches v6e/v7x 256-wide
    # MXU; costs at most 128 extra zero columns).
    n_cols_p = _round_up(n, 256)
    tk = _pick_k_tile(n_cols_p, f_z, budget, max_k)
    tm = _pick_row_tile(n, tk, f_z, f_in_p, f_out_p, budget, max_rows, use_axw)
    n_rows_p = _round_up(n, tm)          # rows padded to the tile, so tm never shrinks
    grid = (n_rows_p // tm, n_cols_p // tk)
    grid_rows = grid[0]

    # Bias (zeros if None), padded to the lane-dense output width.
    if bias is None:
        bias2d = jnp.zeros((1, f_out_p), jnp.float32)
    else:
        bias2d = jnp.pad(bias.reshape(1, f_out).astype(jnp.float32),
                         ((0, 0), (0, f_out_p - f_out)))

    # bf16 MXU operands, zero-padded.
    adj_b = jnp.pad(adj.astype(jnp.bfloat16),
                    ((0, n_rows_p - n), (0, n_cols_p - n)))
    if use_axw:
        x_b = jnp.pad(x.astype(jnp.bfloat16),
                      ((0, n_cols_p - n), (0, f_in_p - f_in)))
        w_b = jnp.pad(weight.astype(jnp.bfloat16),
                      ((0, f_in_p - f_in), (0, f_out_p - f_out)))
        s_b = None
    else:
        # Path B: support = x @ w is a single small XLA dot (kept in f32, then
        # cast), so the Pallas row axis stays fully parallel on v7x's 2 TCs.
        support = jnp.dot(x, weight, preferred_element_type=jnp.float32)
        s_b = jnp.pad(support.astype(jnp.bfloat16),
                      ((0, n_cols_p - n), (0, f_out_p - f_out)))
        x_b = w_b = None

    # VMEM estimate (counts path-A f32 intermediate) -> explicit, generation-aware limit.
    est = (2 * tm * tk * 2 + 2 * tk * f_z * 2 + 2 * tm * f_out_p * 4
           + f_out_p * 4)
    if use_axw:
        est += f_in_p * f_out_p * 2 + tm * f_in_p * 6 + tm * f_out_p * 4
    vmem_limit = int(min(cap * 3 // 4, max(est + (8 << 20), 32 << 20)))

    # Advisory cost estimate.
    if use_axw:
        flops = 2 * n_rows_p * n_cols_p * f_in_p + 2 * n_rows_p * f_in_p * f_out_p
        z_bytes = grid_rows * n_cols_p * f_in_p * 2 + f_in_p * f_out_p * 2
    else:
        flops = 2 * n_rows_p * n_cols_p * f_out_p
        z_bytes = grid_rows * n_cols_p * f_out_p * 2
    bytes_accessed = (n_rows_p * n_cols_p * 2 + z_bytes
                      + f_out_p * 4 + n_rows_p * f_out_p * 4)
    cost = pl.CostEstimate(flops=int(flops), transcendentals=0,
                           bytes_accessed=int(bytes_accessed))

    def _call(resident_mode):
        const_kw = {} if resident_mode is None else {"pipeline_mode": resident_mode}
        if use_axw:
            kernel = _gcn_axw_kernel
            in_specs = [
                pl.BlockSpec((tm, tk), lambda i, k: (i, k)),                 # adj tile
                pl.BlockSpec((tk, f_in_p), lambda i, k: (k, 0)),             # x K-tile
                pl.BlockSpec((f_in_p, f_out_p), lambda i, k: (0, 0), **const_kw),  # w
                pl.BlockSpec((1, f_out_p), lambda i, k: (0, 0), **const_kw),       # bias
            ]
            scratch = [pltpu.VMEM((tm, f_in_p), jnp.float32)]
            args = (adj_b, x_b, w_b, bias2d)
        else:
            kernel = _gcn_spmm_kernel
            in_specs = [
                pl.BlockSpec((tm, tk), lambda i, k: (i, k)),                 # adj tile
                pl.BlockSpec((tk, f_out_p), lambda i, k: (k, 0)),            # support
                pl.BlockSpec((1, f_out_p), lambda i, k: (0, 0), **const_kw),        # bias
            ]
            scratch = []
            args = (adj_b, s_b, bias2d)
        return pl.pallas_call(
            kernel,
            out_shape=jax.ShapeDtypeStruct((n_rows_p, f_out_p), jnp.float32),
            grid_spec=pltpu.PrefetchScalarGridSpec(
                num_scalar_prefetch=0,
                grid=grid,
                in_specs=in_specs,
                out_specs=pl.BlockSpec((tm, f_out_p), lambda i, k: (i, 0)),
                scratch_shapes=scratch),
            compiler_params=pltpu.CompilerParams(
                dimension_semantics=("parallel", "arbitrary"),
                vmem_limit_bytes=vmem_limit),
            cost_estimate=cost,
        )(*args)

    buffered = getattr(pl, "Buffered", None)
    try:
        # Single-buffer the constant-index resident blocks (weight, bias).
        out = _call(buffered(1) if buffered is not None else None)
    except Exception:
        out = _call(None)  # fall back to default double buffering

    return out[:n, :f_out]


def init_params(key, in_features, out_features):
    """Deterministic xavier_uniform_ weight + zero bias (as in reset_parameters)."""
    bound = math.sqrt(6.0 / (in_features + out_features))
    weight = jax.random.uniform(
        key, (in_features, out_features), dtype=jnp.float32,
        minval=-bound, maxval=bound)
    bias = jnp.zeros((out_features,), dtype=jnp.float32)
    return weight, bias


def _make_adj(key, n):
    """Symmetric, row-normalized dense adjacency (what spmm would consume)."""
    a = (jax.random.uniform(key, (n, n)) < 0.1).astype(jnp.float32)
    a = jnp.maximum(a, a.T) + jnp.eye(n, dtype=jnp.float32)
    return a / jnp.sum(a, axis=1, keepdims=True)


if __name__ == "__main__":
    key = jax.random.PRNGKey(0)
    keys = jax.random.split(key, 9)

    # --- Path A: F_in_p <= F_out_p, forced multi-tile grid in both axes ------
    N, F_IN, F_OUT = 512, 64, 128
    w1, b1 = init_params(keys[0], F_IN, F_OUT)
    x1 = jax.random.normal(keys[1], (N, F_IN), dtype=jnp.float32)
    adj1 = _make_adj(keys[2], N)
    out1 = jax.block_until_ready(
        graph_convolution(x1, adj1, w1, b1,
                          max_rows_per_tile=128, max_k_per_tile=256))
    ref1 = adj1 @ (x1 @ w1) + b1[None, :]
    assert out1.shape == (N, F_OUT)
    assert jnp.allclose(out1, ref1, atol=2e-2, rtol=2e-2), float(
        jnp.max(jnp.abs(out1 - ref1)))

    # --- Path B: F_in_p > F_out_p -> XLA support, parallel adj@support kernel -
    N2, F_IN2, F_OUT2 = 256, 256, 64
    w2, b2 = init_params(keys[3], F_IN2, F_OUT2)
    x2 = jax.random.normal(keys[4], (N2, F_IN2), dtype=jnp.float32)
    adj2 = _make_adj(keys[5], N2)
    out2 = jax.block_until_ready(graph_convolution(x2, adj2, w2, b2))
    ref2 = adj2 @ (x2 @ w2) + b2[None, :]
    assert out2.shape == (N2, F_OUT2)
    assert jnp.allclose(out2, ref2, atol=2e-2, rtol=2e-2), float(
        jnp.max(jnp.abs(out2 - ref2)))

    # --- Non-multiple shapes: row / column / F_in / F_out padding, no bias ---
    N3, F_IN3, F_OUT3 = 200, 96, 80
    w3, _ = init_params(keys[6], F_IN3, F_OUT3)
    x3 = jax.random.normal(keys[7], (N3, F_IN3), dtype=jnp.float32)
    adj3 = _make_adj(keys[8], N3)
    out3 = jax.block_until_ready(graph_convolution(x3, adj3, w3, None))
    ref3 = adj3 @ (x3 @ w3)
    assert out3.shape == (N3, F_OUT3)
    assert jnp.allclose(out3, ref3, atol=2e-2, rtol=2e-2), float(
        jnp.max(jnp.abs(out3 - ref3)))

    print("KERNEL_OK")
</pallas_src>

<mosaic_0001>
module attributes {stable_mosaic.version = 11 : i64} {
  func.func @_gcn_axw_kernel(%arg0: i32, %arg1: i32, %arg2: memref<128x256xbf16, #tpu.memory_space<vmem>>, %arg3: memref<256x128xbf16, #tpu.memory_space<vmem>>, %arg4: memref<128x128xbf16, #tpu.memory_space<vmem>>, %arg5: memref<1x128xf32, #tpu.memory_space<vmem>>, %arg6: memref<128x128xf32, #tpu.memory_space<vmem>>, %arg7: memref<128x128xf32, #tpu.memory_space<vmem>>) attributes {dimension_semantics = [#tpu.dimension_semantics<parallel>, #tpu.dimension_semantics<arbitrary>], iteration_bounds = array<i64: 4, 2>, scalar_prefetch = 0 : i64, scratch_operands = 1 : i64, tpu.core_type = #tpu.core_type<tc>, window_params = [{transform_indices = @transform_0, window_bounds = array<i64: 128, 256>}, {transform_indices = @transform_1, window_bounds = array<i64: 256, 128>}, {pipeline_mode = #tpu.pipeline_mode<synchronous>, transform_indices = @transform_2, window_bounds = array<i64: 128, 128>}, {pipeline_mode = #tpu.pipeline_mode<synchronous>, transform_indices = @transform_3, window_bounds = array<i64: 1, 128>}, {transform_indices = @transform_4, window_bounds = array<i64: 128, 128>}]} {
    %c0_i32 = arith.constant 0 : i32
    %0 = arith.cmpi eq, %arg1, %c0_i32 : i32
    %1 = arith.extui %0 : i1 to i32
    %c0_i32_0 = arith.constant 0 : i32
    %2 = arith.cmpi ne, %1, %c0_i32_0 : i32
    scf.if %2 {
      %cst_9 = arith.constant 0.000000e+00 : f32
      %12 = vector.broadcast %cst_9 : f32 to vector<128x128xf32>
      %c0_10 = arith.constant 0 : index
      %c0_11 = arith.constant 0 : index
      %13 = vector.load %arg7[%c0_10, %c0_11] : memref<128x128xf32, #tpu.memory_space<vmem>>, vector<128x128xf32>
      tpu.vector_store %arg7[%c0_10, %c0_11], %12 {strides = array<i32>} : memref<128x128xf32, #tpu.memory_space<vmem>>, vector<128x128xf32>,
    } else {
    }
    %c0 = arith.constant 0 : index
    %c0_1 = arith.constant 0 : index
    %3 = vector.load %arg7[%c0, %c0_1] : memref<128x128xf32, #tpu.memory_space<vmem>>, vector<128x128xf32>
    %c0_2 = arith.constant 0 : index
    %c0_3 = arith.constant 0 : index
    %4 = vector.load %arg2[%c0_2, %c0_3] : memref<128x256xbf16, #tpu.memory_space<vmem>>, vector<128x256xbf16>
    %c0_4 = arith.constant 0 : index
    %c0_5 = arith.constant 0 : index
    %5 = vector.load %arg3[%c0_4, %c0_5] : memref<256x128xbf16, #tpu.memory_space<vmem>>, vector<256x128xbf16>
    %cst = arith.constant dense<0.000000e+00> : vector<128x128xf32>
    %6 = tpu.matmul %4, %5, %cst {dimension_numbers = #tpu.dot_dimension_numbers<[1], [0], [0], [1], [0, 0, 1, 1], [], []>} : vector<128x256xbf16>, vector<256x128xbf16>, vector<128x128xf32> -> vector<128x128xf32>
    %7 = arith.addf %3, %6 : vector<128x128xf32>
    %c0_6 = arith.constant 0 : index
    %c0_7 = arith.constant 0 : index
    %8 = vector.load %arg7[%c0_6, %c0_7] : memref<128x128xf32, #tpu.memory_space<vmem>>, vector<128x128xf32>
    tpu.vector_store %arg7[%c0_6, %c0_7], %7 {strides = array<i32>} : memref<128x128xf32, #tpu.memory_space<vmem>>, vector<128x128xf32>,
    %c1_i32 = arith.constant 1 : i32
    %9 = arith.cmpi eq, %arg1, %c1_i32 : i32
    %10 = arith.extui %9 : i1 to i32
    %c0_i32_8 = arith.constant 0 : i32
    %11 = arith.cmpi ne, %10, %c0_i32_8 : i32
    scf.if %11 {
      %c0_9 = arith.constant 0 : index
      %c0_10 = arith.constant 0 : index
      %12 = vector.load %arg7[%c0_9, %c0_10] : memref<128x128xf32, #tpu.memory_space<vmem>>, vector<128x128xf32>
      %13 = arith.truncf %12 : vector<128x128xf32> to vector<128x128xbf16>
      %c0_11 = arith.constant 0 : index
      %c0_12 = arith.constant 0 : index
      %14 = vector.load %arg4[%c0_11, %c0_12] : memref<128x128xbf16, #tpu.memory_space<vmem>>, vector<128x128xbf16>
      %cst_13 = arith.constant dense<0.000000e+00> : vector<128x128xf32>
      %15 = tpu.matmul %13, %14, %cst_13 {dimension_numbers = #tpu.dot_dimension_numbers<[1], [0], [0], [1], [0, 0, 1, 1], [], []>} : vector<128x128xbf16>, vector<128x128xbf16>, vector<128x128xf32> -> vector<128x128xf32>
      %c0_14 = arith.constant 0 : index
      %c0_15 = arith.constant 0 : index
      %16 = vector.load %arg5[%c0_14, %c0_15] : memref<1x128xf32, #tpu.memory_space<vmem>>, vector<1x128xf32>
      %17 = vector.broadcast %16 : vector<1x128xf32> to vector<128x128xf32>
      %18 = arith.addf %15, %17 : vector<128x128xf32>
      %c0_16 = arith.constant 0 : index
      %c0_17 = arith.constant 0 : index
      %19 = vector.load %arg6[%c0_16, %c0_17] : memref<128x128xf32, #tpu.memory_space<vmem>>, vector<128x128xf32>
      tpu.vector_store %arg6[%c0_16, %c0_17], %18 {strides = array<i32>} : memref<128x128xf32, #tpu.memory_space<vmem>>, vector<128x128xf32>,
    } else {
    }
    return
  }
  func.func @transform_0(%arg0: i32, %arg1: i32) -> (i32, i32) {
    %c0_i32 = arith.constant 0 : i32
    return %arg0, %arg1 : i32, i32
  }
  func.func @transform_1(%arg0: i32, %arg1: i32) -> (i32, i32) {
    %c0_i32 = arith.constant 0 : i32
    %c0_i32_0 = arith.constant 0 : i32
    return %arg1, %c0_i32 : i32, i32
  }
  func.func @transform_2(%arg0: i32, %arg1: i32) -> (i32, i32) {
    %c0_i32 = arith.constant 0 : i32
    %c0_i32_0 = arith.constant 0 : i32
    %c0_i32_1 = arith.constant 0 : i32
    return %c0_i32, %c0_i32_0 : i32, i32
  }
  func.func @transform_3(%arg0: i32, %arg1: i32) -> (i32, i32) {
    %c0_i32 = arith.constant 0 : i32
    %c0_i32_0 = arith.constant 0 : i32
    %c0_i32_1 = arith.constant 0 : i32
    return %c0_i32, %c0_i32_0 : i32, i32
  }
  func.func @transform_4(%arg0: i32, %arg1: i32) -> (i32, i32) {
    %c0_i32 = arith.constant 0 : i32
    %c0_i32_0 = arith.constant 0 : i32
    return %arg0, %c0_i32 : i32, i32
  }
}

module attributes {stable_mosaic.version = 11 : i64} {
  func.func @_gcn_axw_kernel(%arg0: i32, %arg1: i32, %arg2: memref<128x256xbf16, #tpu.memory_space<vmem>>, %arg3: memref<256x128xbf16, #tpu.memory_space<vmem>>, %arg4: memref<128x128xbf16, #tpu.memory_space<vmem>>, %arg5: memref<1x128xf32, #tpu.memory_space<vmem>>, %arg6: memref<128x128xf32, #tpu.memory_space<vmem>>, %arg7: memref<128x128xf32, #tpu.memory_space<vmem>>) attributes {dimension_semantics = [#tpu.dimension_semantics<parallel>, #tpu.dimension_semantics<arbitrary>], iteration_bounds = array<i64: 4, 2>, scalar_prefetch = 0 : i64, scratch_operands = 1 : i64, tpu.core_type = #tpu.core_type<tc>, window_params = [{transform_indices = @transform_0, window_bounds = array<i64: 128, 256>}, {transform_indices = @transform_1, window_bounds = array<i64: 256, 128>}, {pipeline_mode = #tpu.pipeline_mode<synchronous>, transform_indices = @transform_2, window_bounds = array<i64: 128, 128>}, {pipeline_mode = #tpu.pipeline_mode<synchronous>, transform_indices = @transform_3, window_bounds = array<i64: 1, 128>}, {transform_indices = @transform_4, window_bounds = array<i64: 128, 128>}]} {
    %c0_i32 = arith.constant 0 : i32
    %0 = arith.cmpi eq, %arg1, %c0_i32 : i32
    %1 = arith.extui %0 : i1 to i32
    %c0_i32_0 = arith.constant 0 : i32
    %2 = arith.cmpi ne, %1, %c0_i32_0 : i32
    scf.if %2 {
      %cst_9 = arith.constant 0.000000e+00 : f32
      %12 = vector.broadcast %cst_9 : f32 to vector<128x128xf32>
      %c0_10 = arith.constant 0 : index
      %c0_11 = arith.constant 0 : index
      %13 = vector.load %arg7[%c0_10, %c0_11] : memref<128x128xf32, #tpu.memory_space<vmem>>, vector<128x128xf32>
      tpu.vector_store %arg7[%c0_10, %c0_11], %12 {strides = array<i32>} : memref<128x128xf32, #tpu.memory_space<vmem>>, vector<128x128xf32>,
    } else {
    }
    %c0 = arith.constant 0 : index
    %c0_1 = arith.constant 0 : index
    %3 = vector.load %arg7[%c0, %c0_1] : memref<128x128xf32, #tpu.memory_space<vmem>>, vector<128x128xf32>
    %c0_2 = arith.constant 0 : index
    %c0_3 = arith.constant 0 : index
    %4 = vector.load %arg2[%c0_2, %c0_3] : memref<128x256xbf16, #tpu.memory_space<vmem>>, vector<128x256xbf16>
    %c0_4 = arith.constant 0 : index
    %c0_5 = arith.constant 0 : index
    %5 = vector.load %arg3[%c0_4, %c0_5] : memref<256x128xbf16, #tpu.memory_space<vmem>>, vector<256x128xbf16>
    %cst = arith.constant dense<0.000000e+00> : vector<128x128xf32>
    %6 = tpu.matmul %4, %5, %cst {dimension_numbers = #tpu.dot_dimension_numbers<[1], [0], [0], [1], [0, 0, 1, 1], [], []>} : vector<128x256xbf16>, vector<256x128xbf16>, vector<128x128xf32> -> vector<128x128xf32>
    %7 = arith.addf %3, %6 : vector<128x128xf32>
    %c0_6 = arith.constant 0 : index
    %c0_7 = arith.constant 0 : index
    %8 = vector.load %arg7[%c0_6, %c0_7] : memref<128x128xf32, #tpu.memory_space<vmem>>, vector<128x128xf32>
    tpu.vector_store %arg7[%c0_6, %c0_7], %7 {strides = array<i32>} : memref<128x128xf32, #tpu.memory_space<vmem>>, vector<128x128xf32>,
    %c1_i32 = arith.constant 1 : i32
    %9 = arith.cmpi eq, %arg1, %c1_i32 : i32
    %10 = arith.extui %9 : i1 to i32
    %c0_i32_8 = arith.constant 0 : i32
    %11 = arith.cmpi ne, %10, %c0_i32_8 : i32
    scf.if %11 {
      %c0_9 = arith.constant 0 : index
      %c0_10 = arith.constant 0 : index
      %12 = vector.load %arg7[%c0_9, %c0_10] : memref<128x128xf32, #tpu.memory_space<vmem>>, vector<128x128xf32>
      %13 = arith.truncf %12 : vector<128x128xf32> to vector<128x128xbf16>
      %c0_11 = arith.constant 0 : index
      %c0_12 = arith.constant 0 : index
      %14 = vector.load %arg4[%c0_11, %c0_12] : memref<128x128xbf16, #tpu.memory_space<vmem>>, vector<128x128xbf16>
      %cst_13 = arith.constant dense<0.000000e+00> : vector<128x128xf32>
      %15 = tpu.matmul %13, %14, %cst_13 {dimension_numbers = #tpu.dot_dimension_numbers<[1], [0], [0], [1], [0, 0, 1, 1], [], []>} : vector<128x128xbf16>, vector<128x128xbf16>, vector<128x128xf32> -> vector<128x128xf32>
      %c0_14 = arith.constant 0 : index
      %c0_15 = arith.constant 0 : index
      %16 = vector.load %arg5[%c0_14, %c0_15] : memref<1x128xf32, #tpu.memory_space<vmem>>, vector<1x128xf32>
      %17 = vector.broadcast %16 : vector<1x128xf32> to vector<128x128xf32>
      %18 = arith.addf %15, %17 : vector<128x128xf32>
      %c0_16 = arith.constant 0 : index
      %c0_17 = arith.constant 0 : index
      %19 = vector.load %arg6[%c0_16, %c0_17] : memref<128x128xf32, #tpu.memory_space<vmem>>, vector<128x128xf32>
      tpu.vector_store %arg6[%c0_16, %c0_17], %18 {strides = array<i32>} : memref<128x128xf32, #tpu.memory_space<vmem>>, vector<128x128xf32>,
    } else {
    }
    return
  }
  func.func @transform_0(%arg0: i32, %arg1: i32) -> (i32, i32) {
    %c0_i32 = arith.constant 0 : i32
    return %arg0, %arg1 : i32, i32
  }
  func.func @transform_1(%arg0: i32, %arg1: i32) -> (i32, i32) {
    %c0_i32 = arith.constant 0 : i32
    %c0_i32_0 = arith.constant 0 : i32
    return %arg1, %c0_i32 : i32, i32
  }
  func.func @transform_2(%arg0: i32, %arg1: i32) -> (i32, i32) {
    %c0_i32 = arith.constant 0 : i32
    %c0_i32_0 = arith.constant 0 : i32
    %c0_i32_1 = arith.constant 0 : i32
    return %c0_i32, %c0_i32_0 : i32, i32
  }
  func.func @transform_3(%arg0: i32, %arg1: i32) -> (i32, i32) {
    %c0_i32 = arith.constant 0 : i32
    %c0_i32_0 = arith.constant 0 : i32
    %c0_i32_1 = arith.constant 0 : i32
    return %c0_i32, %c0_i32_0 : i32, i32
  }
  func.func @transform_4(%arg0: i32, %arg1: i32) -> (i32, i32) {
    %c0_i32 = arith.constant 0 : i32
    %c0_i32_0 = arith.constant 0 : i32
    return %arg0, %c0_i32 : i32, i32
  }
}

</mosaic_0001>

<llo_original>
// kernel: tpu_custom_call.1
$region0: #{tpu_custom_call.1}
  #allocation0 [shape = 'u32[]', space=smem, size = 0x4, offset = 0x4, fixed_abs, tag = 'smem constant byte address 0x4 - core index']
  #allocation1 [shape = 'u32[144,128]{1,0:T(1,128)}', space=vmem, size = 0x12000, scoped, tag = 'internal scratch']
  #allocation2 [shape = 'f32[128,128]{1,0:T(8,128)}', space=vmem, size = 0x10000, scoped, tag = 'scratch operand']
  %s0 = inlined_call_operand.hbm [shape: bf16[512,512], index: 0, kind: input, shape index: {}]
  %s1 = inlined_call_operand.hbm [shape: bf16[512,128], index: 1, kind: input, shape index: {}]
  %s2 = inlined_call_operand.hbm [shape: bf16[128,128], index: 2, kind: input, shape index: {}]
  %s3 = inlined_call_operand.vmem [shape: f32[1,128], index: 3, kind: input, shape index: {}]
  %s4 = inlined_call_operand.hbm [shape: f32[512,128], index: 4, kind: output, shape index: {}]
  %s5 = sld [smem:[#allocation0]]
  $region69: #{tpu_custom_call.1} parent=0
    _
  %s7 = ssub.s32 1, %s5
  %s8 = scalar_select 0, %s7, %s5
  $region1: #{tpu_custom_call.1} parent=0
    #allocation3 [shape = 'u8[131072]{0}', space=vmem, size = 0x20000, scoped, tag = 'input window, operand 0']
    #allocation4 [shape = 's32[2]{0}', space=sflag, size = 0x8, scoped, tag = 'scoped memory for tpu_custom_call.1']
    #allocation5 [shape = 's32[2]{0}', space=sflag, size = 0x8, scoped, tag = 'scoped memory for tpu_custom_call.1']
    #allocation6 [shape = 'u8[131072]{0}', space=vmem, size = 0x20000, scoped, tag = 'input window, operand 1']
    #allocation7 [shape = 's32[2]{0}', space=sflag, size = 0x8, scoped, tag = 'scoped memory for tpu_custom_call.1']
    #allocation8 [shape = 'u8[32768]{0}', space=vmem, size = 0x8000, scoped, tag = 'input window, operand 2, single buffered']
    #allocation9 [shape = 'u8[131072]{0}', space=vmem, size = 0x20000, scoped, tag = 'output window, operand 0']
    %9 = vsyncpa [#allocation4], 0
    %s10 = scalar_lea.sflag [#allocation4], 1
    %11 = vsyncpa %s10, 0
    %12 = vsyncpa [#allocation7], 0
    %s13 = scalar_lea.sflag [#allocation7], 1
    %14 = vsyncpa %s13, 0
    %15 = vsyncpa [#allocation5], 0
    %s16 = scalar_lea.sflag [#allocation5], 1
    %17 = vsyncpa %s16, 0
    loop: start=0, step=1, limit=10
    $region2: #{tpu_custom_call.1} parent=1 // loop_pre_header
      _
    $region3: #{tpu_custom_call.1} parent=1 // loop_header
      %s19 = sphi 0, %s23
      %p20 = scmp.ge.s32.totalorder %s19, 10
      %s26 = sphi 0, %s38
      %s27 = sphi 0, %s34
      %s28 = sphi 0, %s26
      %s29 = sphi 0, %s27
      %s30 = sphi 0, %s28
      %s31 = sphi 0, %s29
      %s43 = sphi 0, %s45
      %s46 = sphi 0, %s43
      %s47 = sphi 0, %s46
      %s63 = sphi 0, %s47
      %s69 = sphi 0, %s71
      %s72 = sphi 0, %s69
      %s73 = sphi 0, %s72
      %s89 = sphi 0, %s73
      %s93 = sphi 0, %s93
      %s95 = sphi 0, %s93
      %s96 = sphi 0, %s95
      %s110 = sphi 0, %s96
      %s114 = sphi 0, %s114
      %s116 = sphi 0, %s114
      %s117 = sphi 0, %s116
      %s131 = sphi 0, %s117
      %s137 = sphi 0, %s139
      %s140 = sphi 0, %s137
      %s141 = sphi 0, %s140
      %s157 = sphi 0, %s141
    $region4: #{tpu_custom_call.1} parent=1 // loop_header_branch
      %22 = sbr.rel (%p20) target = $region8
    $region5: #{tpu_custom_call.1} parent=1 // loop_body
      %s24 = ssub.s32 %s19, 1
      %s25 = ssub.s32 %s19, 2
      %s32 = sadd.s32 1, %s27
      %p33 = scmp.ge.s32.totalorder %s32, 2
      %s34 = scalar_select %p33, 0, %s32
      %s35 = sadd.s32 1, %s26
      %s36 = scalar_select %p33, %s35, %s26
      %p37 = scmp.ge.s32.totalorder %s36, 4
      %s38 = scalar_select %p37, 0, %s36
      %s39 = ssub.s32 %s26, %s38
      %s40 = ssub.s32 %s27, %s34
      %s41 = sor.u32 %s39, %s40
      %p42 = scmp.eq.s32.totalorder %s41, 0
      %s44 = sadd.s32 %s43, 1
      %s45 = scalar_select %p42, %s43, %s44
      %p48 = pneg %p42
      %p49 = scmp.eq.s32.totalorder %s19, 7
      %p50 = por %p48, %p49
      %p51 = scmp.ne.s32.totalorder %s43, %s46
      %p52 = scmp.eq.s32.totalorder %s19, 0
      %p53 = por %p51, %p52
      %p54 = scmp.ne.s32.totalorder %s43, %s46
      %p55 = scmp.eq.s32.totalorder %s24, 7
      %p56 = por %p54, %p55
      %p57 = scmp.ne.s32.totalorder %s46, %s47
      %p58 = scmp.eq.s32.totalorder %s24, 0
      %p59 = por %p57, %p58
      %p60 = scmp.ne.s32.totalorder %s46, %s47
      %p61 = scmp.eq.s32.totalorder %s25, 7
      %p62 = por %p60, %p61
      %p64 = scmp.ne.s32.totalorder %s47, %s63
      %p65 = scmp.eq.s32.totalorder %s25, 0
      %p66 = por %p64, %p65
      %s67 = ssub.s32 %s27, %s34
      %p68 = scmp.eq.s32.totalorder %s67, 0
      %s70 = sadd.s32 %s69, 1
      %s71 = scalar_select %p68, %s69, %s70
      %p74 = pneg %p68
      %p75 = scmp.eq.s32.totalorder %s19, 7
      %p76 = por %p74, %p75
      %p77 = scmp.ne.s32.totalorder %s69, %s72
      %p78 = scmp.eq.s32.totalorder %s19, 0
      %p79 = por %p77, %p78
      %p80 = scmp.ne.s32.totalorder %s69, %s72
      %p81 = scmp.eq.s32.totalorder %s24, 7
      %p82 = por %p80, %p81
      %p83 = scmp.ne.s32.totalorder %s72, %s73
      %p84 = scmp.eq.s32.totalorder %s24, 0
      %p85 = por %p83, %p84
      %p86 = scmp.ne.s32.totalorder %s72, %s73
      %p87 = scmp.eq.s32.totalorder %s25, 7
      %p88 = por %p86, %p87
      %p90 = scmp.ne.s32.totalorder %s73, %s89
      %p91 = scmp.eq.s32.totalorder %s25, 0
      %p92 = por %p90, %p91
      %s94 = sadd.s32 %s93, 1
      %p97 = scmp.eq.s32.totalorder %s19, 7
      %p98 = scmp.ne.s32.totalorder %s93, %s95
      %p99 = scmp.eq.s32.totalorder %s19, 0
      %p100 = por %p98, %p99
      %p101 = scmp.ne.s32.totalorder %s93, %s95
      %p102 = scmp.eq.s32.totalorder %s24, 7
      %p103 = por %p101, %p102
      %p104 = scmp.ne.s32.totalorder %s95, %s96
      %p105 = scmp.eq.s32.totalorder %s24, 0
      %p106 = por %p104, %p105
      %p107 = scmp.ne.s32.totalorder %s95, %s96
      %p108 = scmp.eq.s32.totalorder %s25, 7
      %p109 = por %p107, %p108
      %p111 = scmp.ne.s32.totalorder %s96, %s110
      %p112 = scmp.eq.s32.totalorder %s25, 0
      %p113 = por %p111, %p112
      %s115 = sadd.s32 %s114, 1
      %p118 = scmp.eq.s32.totalorder %s19, 7
      %p119 = scmp.ne.s32.totalorder %s114, %s116
      %p120 = scmp.eq.s32.totalorder %s19, 0
      %p121 = por %p119, %p120
      %p122 = scmp.ne.s32.totalorder %s114, %s116
      %p123 = scmp.eq.s32.totalorder %s24, 7
      %p124 = por %p122, %p123
      %p125 = scmp.ne.s32.totalorder %s116, %s117
      %p126 = scmp.eq.s32.totalorder %s24, 0
      %p127 = por %p125, %p126
      %p128 = scmp.ne.s32.totalorder %s116, %s117
      %p129 = scmp.eq.s32.totalorder %s25, 7
      %p130 = por %p128, %p129
      %p132 = scmp.ne.s32.totalorder %s117, %s131
      %p133 = scmp.eq.s32.totalorder %s25, 0
      %p134 = por %p132, %p133
      %s135 = ssub.s32 %s26, %s38
      %p136 = scmp.eq.s32.totalorder %s135, 0
      %s138 = sadd.s32 %s137, 1
      %s139 = scalar_select %p136, %s137, %s138
      %p142 = pneg %p136
      %p143 = scmp.eq.s32.totalorder %s19, 7
      %p144 = por %p142, %p143
      %p145 = scmp.ne.s32.totalorder %s137, %s140
      %p146 = scmp.eq.s32.totalorder %s19, 0
      %p147 = por %p145, %p146
      %p148 = scmp.ne.s32.totalorder %s137, %s140
      %p149 = scmp.eq.s32.totalorder %s24, 7
      %p150 = por %p148, %p149
      %p151 = scmp.ne.s32.totalorder %s140, %s141
      %p152 = scmp.eq.s32.totalorder %s24, 0
      %p153 = por %p151, %p152
      %p154 = scmp.ne.s32.totalorder %s140, %s141
      %p155 = scmp.eq.s32.totalorder %s25, 7
      %p156 = por %p154, %p155
      %p158 = scmp.ne.s32.totalorder %s141, %s157
      %p159 = scmp.eq.s32.totalorder %s25, 0
      %p160 = por %p158, %p159
      %p161 = scmp.le.s32.totalorder 1, %s19
      %p162 = scmp.lt.s32.totalorder %s19, 9
      %p163 = pnand %p161, %p162
      %p164 = pneg %p163
      // Predicated region
      $region9: #{tpu_custom_call.1} parent=5 // pred_check
        _
      $region10: #{tpu_custom_call.1} parent=5 // pred_check_branch
        %166 = sbr.rel (%p163) target = $region12
      $region11: #{tpu_custom_call.1} parent=5 // pred_region
        %s167 = ssub.s32 %s19, 1
        // Predicated region
        $region13: #{tpu_custom_call.1} parent=11 // pred_check
          %p168 = pneg %p106
        $region14: #{tpu_custom_call.1} parent=11 // pred_check_branch
          %170 = sbr.rel (%p168) target = $region16
        $region15: #{tpu_custom_call.1} parent=11 // pred_region
          %s172 = ssub.s32 1024, 1024
          %173 = vsyncadd [#allocation7], %s172
          %s174 = sshll.u32 [#allocation8], 4
          %s175 = int_to_ptr.vmem [resolvable:$true] %s174
          %180 = dma.hbm_to_vmem [thread:$0]  %s2, 1024, %s175, [#allocation7], 64, 64, 4
        $region16: #{tpu_custom_call.1} parent=11 // pred_fallthru
          _
        // Predicated region
        $region17: #{tpu_custom_call.1} parent=11 // pred_check
          %p181 = pneg %p127
        $region18: #{tpu_custom_call.1} parent=11 // pred_check_branch
          %183 = sbr.rel (%p181) target = $region20
        $region19: #{tpu_custom_call.1} parent=11 // pred_region
          _
        $region20: #{tpu_custom_call.1} parent=11 // pred_fallthru
          _
      $region12: #{tpu_custom_call.1} parent=5 // pred_fallthru
        _
      %p184 = scmp.lt.s32.totalorder %s19, 8
      // Predicated region
      $region21: #{tpu_custom_call.1} parent=5 // pred_check
        %p185 = pneg %p184
      $region22: #{tpu_custom_call.1} parent=5 // pred_check_branch
        %187 = sbr.rel (%p185) target = $region24
      $region23: #{tpu_custom_call.1} parent=5 // pred_region
        // Predicated region
        $region25: #{tpu_custom_call.1} parent=23 // pred_check
          %p188 = pneg %p53
        $region26: #{tpu_custom_call.1} parent=23 // pred_check_branch
          %190 = sbr.rel (%p188) target = $region28
        $region27: #{tpu_custom_call.1} parent=23 // pred_region
          %s191 = sand.u32 %s43, 1
          %s192 = scalar_lea.sflag [#allocation4], %s191
          %s193 = sand.u32 %s43, 1
          %s194 = smul.addr %s193, 128
          %s195 = scalar_lea.vmem [#allocation3], %s194
          %s196 = smul.u32 16, %s26
          %s197 = smul.u32 2, %s27
          %s199 = ssub.s32 2048, 2048
          %200 = vsyncadd %s192, %s199
          %s201 = smul.addr %s196, 4
          %s202 = sadd.s32 %s197, %s201
          %s203 = smul.addr %s202, 64
          %s204 = scalar_lea.hbm %s0, %s203
          %s205 = sshll.u32 %s195, 4
          %s206 = int_to_ptr.vmem [resolvable:$true] %s205
          %211 = dma.hbm_to_vmem [thread:$0]  %s204, 2048, %s206, %s192, 256, 128, 8
        $region28: #{tpu_custom_call.1} parent=23 // pred_fallthru
          _
        // Predicated region
        $region29: #{tpu_custom_call.1} parent=23 // pred_check
          %p212 = pneg %p79
        $region30: #{tpu_custom_call.1} parent=23 // pred_check_branch
          %214 = sbr.rel (%p212) target = $region32
        $region31: #{tpu_custom_call.1} parent=23 // pred_region
          %s215 = sand.u32 %s19, 1
          %s216 = scalar_lea.sflag [#allocation7], %s215
          %s217 = sand.u32 %s69, 1
          %s218 = smul.addr %s217, 128
          %s219 = scalar_lea.vmem [#allocation6], %s218
          %s220 = smul.u32 32, %s27
          %s222 = ssub.s32 2048, 2048
          %223 = vsyncadd %s216, %s222
          %s224 = smul.addr %s220, 64
          %s225 = scalar_lea.hbm %s1, %s224
          %s226 = sshll.u32 %s219, 4
          %s227 = int_to_ptr.vmem [resolvable:$true] %s226
          %232 = dma.hbm_to_vmem [thread:$0]  %s225, 2048, %s227, %s216, 64, 64, 4
        $region32: #{tpu_custom_call.1} parent=23 // pred_fallthru
          _
      $region24: #{tpu_custom_call.1} parent=5 // pred_fallthru
        _
      %p233 = scmp.le.s32.totalorder 1, %s19
      %p234 = scmp.lt.s32.totalorder %s19, 9
      %p235 = pnand %p233, %p234
      %p236 = pneg %p235
      // Predicated region
      $region33: #{tpu_custom_call.1} parent=5 // pred_check
        _
      $region34: #{tpu_custom_call.1} parent=5 // pred_check_branch
        %238 = sbr.rel (%p235) target = $region36
      $region35: #{tpu_custom_call.1} parent=5 // pred_region
        %s239 = ssub.s32 %s19, 1
        %s240 = sand.u32 %s46, 1
        %s241 = scalar_lea.sflag [#allocation4], %s240
        %s242 = sand.u32 %s46, 1
        %s243 = smul.addr %s242, 128
        %s244 = scalar_lea.vmem [#allocation3], %s243
        // Predicated region
        $region37: #{tpu_custom_call.1} parent=35 // pred_check
          %p245 = pneg %p59
        $region38: #{tpu_custom_call.1} parent=35 // pred_check_branch
          %247 = sbr.rel (%p245) target = $region40
        $region39: #{tpu_custom_call.1} parent=35 // pred_region
          %248 = dma.done %s241, 2048
        $region40: #{tpu_custom_call.1} parent=35 // pred_fallthru
          _
        %s249 = sand.u32 %s24, 1
        %s250 = scalar_lea.sflag [#allocation7], %s249
        %s251 = sand.u32 %s72, 1
        %s252 = smul.addr %s251, 128
        %s253 = scalar_lea.vmem [#allocation6], %s252
        // Predicated region
        $region41: #{tpu_custom_call.1} parent=35 // pred_check
          %p254 = pneg %p85
        $region42: #{tpu_custom_call.1} parent=35 // pred_check_branch
          %256 = sbr.rel (%p254) target = $region44
        $region43: #{tpu_custom_call.1} parent=35 // pred_region
          %257 = dma.done %s250, 2048
        $region44: #{tpu_custom_call.1} parent=35 // pred_fallthru
          _
        // Predicated region
        $region45: #{tpu_custom_call.1} parent=35 // pred_check
          %p258 = pneg %p106
        $region46: #{tpu_custom_call.1} parent=35 // pred_check_branch
          %260 = sbr.rel (%p258) target = $region48
        $region47: #{tpu_custom_call.1} parent=35 // pred_region
          %261 = dma.done [#allocation7], 1024
        $region48: #{tpu_custom_call.1} parent=35 // pred_fallthru
          _
        %s262 = sand.u32 %s46, 1
        %s263 = scalar_lea.sflag [#allocation4], %s262
        %s264 = sand.u32 %s46, 1
        %s265 = smul.addr %s264, 128
        %s266 = scalar_lea.vmem [#allocation3], %s265
        %p267 = pneg %p59
        %p268 = pneg %p56
        %s269 = sand.u32 %s24, 1
        %s270 = scalar_lea.sflag [#allocation7], %s269
        %s271 = sand.u32 %s72, 1
        %s272 = smul.addr %s271, 128
        %s273 = scalar_lea.vmem [#allocation6], %s272
        %p274 = pneg %p85
        %p275 = pneg %p82
        %p276 = pneg %p106
        %p277 = pneg %p103
        %p278 = pneg %p127
        %p279 = pneg %p124
        %p280 = pneg %p153
        %p281 = pneg %p150
        %s282 = sand.u32 %s140, 1
        %s283 = scalar_lea.sflag [#allocation5], %s282
        %s284 = sand.u32 %s140, 1
        %s285 = smul.addr %s284, 128
        %s286 = scalar_lea.vmem [#allocation9], %s285
        %s287 = smul.u32 16, %s28
        %s288 = smul.u32 2, %s29
        %s289 = smul.u32 32, %s29
        %s290 = smul.u32 16, %s28
        %p292 = scmp.eq.s32.totalorder %s29, 0
        // Predicated region
        $region49: #{tpu_custom_call.1} parent=35 // pred_check
          %p293 = pneg %p292
        $region50: #{tpu_custom_call.1} parent=35 // pred_check_branch
          %295 = sbr.rel (%p293) target = $region52
        $region51: #{tpu_custom_call.1} parent=35 // pred_region
          %296 = vst [vmem:[#allocation2] sm:$0xff] 0.0
          %297 = vst [vmem:[#allocation2 + $0x8] sm:$0xff] 0.0
          %298 = vst [vmem:[#allocation2 + $0x10] sm:$0xff] 0.0
          %299 = vst [vmem:[#allocation2 + $0x18] sm:$0xff] 0.0
          %300 = vst [vmem:[#allocation2 + $0x20] sm:$0xff] 0.0
          %301 = vst [vmem:[#allocation2 + $0x28] sm:$0xff] 0.0
          %302 = vst [vmem:[#allocation2 + $0x30] sm:$0xff] 0.0
          %303 = vst [vmem:[#allocation2 + $0x38] sm:$0xff] 0.0
          %304 = vst [vmem:[#allocation2 + $0x40] sm:$0xff] 0.0
          %305 = vst [vmem:[#allocation2 + $0x48] sm:$0xff] 0.0
          %306 = vst [vmem:[#allocation2 + $0x50] sm:$0xff] 0.0
          %307 = vst [vmem:[#allocation2 + $0x58] sm:$0xff] 0.0
          %308 = vst [vmem:[#allocation2 + $0x60] sm:$0xff] 0.0
          %309 = vst [vmem:[#allocation2 + $0x68] sm:$0xff] 0.0
          %310 = vst [vmem:[#allocation2 + $0x70] sm:$0xff] 0.0
          %311 = vst [vmem:[#allocation2 + $0x78] sm:$0xff] 0.0
        $region52: #{tpu_custom_call.1} parent=35 // pred_fallthru
          _
        %v312 = vld [vmem:[#allocation2] sm:$0xff]
        %v313 = vld [vmem:[#allocation2 + $0x8] sm:$0xff]
        %v314 = vld [vmem:[#allocation2 + $0x10] sm:$0xff]
        %v315 = vld [vmem:[#allocation2 + $0x18] sm:$0xff]
        %v316 = vld [vmem:[#allocation2 + $0x20] sm:$0xff]
        %v317 = vld [vmem:[#allocation2 + $0x28] sm:$0xff]
        %v318 = vld [vmem:[#allocation2 + $0x30] sm:$0xff]
        %v319 = vld [vmem:[#allocation2 + $0x38] sm:$0xff]
        %v320 = vld [vmem:[#allocation2 + $0x40] sm:$0xff]
        %v321 = vld [vmem:[#allocation2 + $0x48] sm:$0xff]
        %v322 = vld [vmem:[#allocation2 + $0x50] sm:$0xff]
        %v323 = vld [vmem:[#allocation2 + $0x58] sm:$0xff]
        %v324 = vld [vmem:[#allocation2 + $0x60] sm:$0xff]
        %v325 = vld [vmem:[#allocation2 + $0x68] sm:$0xff]
        %v326 = vld [vmem:[#allocation2 + $0x70] sm:$0xff]
        %v327 = vld [vmem:[#allocation2 + $0x78] sm:$0xff]
        %v328 = vld [vmem:[%s244] sm:$0xff]
        %v329 = vld [vmem:[%s244 + $0x8] sm:$0xff]
        %v330 = vld [vmem:[%s244 + $0x10] sm:$0xff]
        %v331 = vld [vmem:[%s244 + $0x18] sm:$0xff]
        %v332 = vld [vmem:[%s244 + $0x20] sm:$0xff]
        %v333 = vld [vmem:[%s244 + $0x28] sm:$0xff]
        %v334 = vld [vmem:[%s244 + $0x30] sm:$0xff]
        %v335 = vld [vmem:[%s244 + $0x38] sm:$0xff]
        %v336 = vld [vmem:[%s244 + $0x40] sm:$0xff]
        %v337 = vld [vmem:[%s244 + $0x48] sm:$0xff]
        %v338 = vld [vmem:[%s244 + $0x50] sm:$0xff]
        %v339 = vld [vmem:[%s244 + $0x58] sm:$0xff]
        %v340 = vld [vmem:[%s244 + $0x60] sm:$0xff]
        %v341 = vld [vmem:[%s244 + $0x68] sm:$0xff]
        %v342 = vld [vmem:[%s244 + $0x70] sm:$0xff]
        %v343 = vld [vmem:[%s244 + $0x78] sm:$0xff]
        %v344 = vld [vmem:[%s253] sm:$0xf]
        %v345 = vld [vmem:[%s253 + $0x4] sm:$0xf]
        %v346 = vld [vmem:[%s253 + $0x8] sm:$0xf]
        %v347 = vld [vmem:[%s253 + $0xc] sm:$0xf]
        %v348 = vld [vmem:[%s253 + $0x10] sm:$0xf]
        %v349 = vld [vmem:[%s253 + $0x14] sm:$0xf]
        %v350 = vld [vmem:[%s253 + $0x18] sm:$0xf]
        %v351 = vld [vmem:[%s253 + $0x1c] sm:$0xf]
        %v352 = vld [vmem:[%s253 + $0x20] sm:$0xf]
        %v353 = vld [vmem:[%s253 + $0x24] sm:$0xf]
        %v354 = vld [vmem:[%s253 + $0x28] sm:$0xf]
        %v355 = vld [vmem:[%s253 + $0x2c] sm:$0xf]
        %v356 = vld [vmem:[%s253 + $0x30] sm:$0xf]
        %v357 = vld [vmem:[%s253 + $0x34] sm:$0xf]
        %v358 = vld [vmem:[%s253 + $0x38] sm:$0xf]
        %v359 = vld [vmem:[%s253 + $0x3c] sm:$0xf]
        %v360 = vld [vmem:[%s253 + $0x40] sm:$0xf]
        %v361 = vld [vmem:[%s253 + $0x44] sm:$0xf]
        %v362 = vld [vmem:[%s253 + $0x48] sm:$0xf]
        %v363 = vld [vmem:[%s253 + $0x4c] sm:$0xf]
        %v364 = vld [vmem:[%s253 + $0x50] sm:$0xf]
        %v365 = vld [vmem:[%s253 + $0x54] sm:$0xf]
        %v366 = vld [vmem:[%s253 + $0x58] sm:$0xf]
        %v367 = vld [vmem:[%s253 + $0x5c] sm:$0xf]
        %v368 = vld [vmem:[%s253 + $0x60] sm:$0xf]
        %v369 = vld [vmem:[%s253 + $0x64] sm:$0xf]
        %v370 = vld [vmem:[%s253 + $0x68] sm:$0xf]
        %v371 = vld [vmem:[%s253 + $0x6c] sm:$0xf]
        %v372 = vld [vmem:[%s253 + $0x70] sm:$0xf]
        %v373 = vld [vmem:[%s253 + $0x74] sm:$0xf]
        %v374 = vld [vmem:[%s253 + $0x78] sm:$0xf]
        %v375 = vld [vmem:[%s253 + $0x7c] sm:$0xf]
        %v392 = vunpack.c.l.b16 %v328
        %v393 = vunpack.c.h.b16 %v328
        %v394 = vunpack.c.l.b16 %v329
        %v395 = vunpack.c.h.b16 %v329
        %v396 = vunpack.c.l.b16 %v330
        %v397 = vunpack.c.h.b16 %v330
        %v398 = vunpack.c.l.b16 %v331
        %v399 = vunpack.c.h.b16 %v331
        %v400 = vunpack.c.l.b16 %v332
        %v401 = vunpack.c.h.b16 %v332
        %v402 = vunpack.c.l.b16 %v333
        %v403 = vunpack.c.h.b16 %v333
        %v404 = vunpack.c.l.b16 %v334
        %v405 = vunpack.c.h.b16 %v334
        %v406 = vunpack.c.l.b16 %v335
        %v407 = vunpack.c.h.b16 %v335
        %v408 = vunpack.c.l.b16 %v336
        %v409 = vunpack.c.h.b16 %v336
        %v410 = vunpack.c.l.b16 %v337
        %v411 = vunpack.c.h.b16 %v337
        %v412 = vunpack.c.l.b16 %v338
        %v413 = vunpack.c.h.b16 %v338
        %v414 = vunpack.c.l.b16 %v339
        %v415 = vunpack.c.h.b16 %v339
        %v416 = vunpack.c.l.b16 %v340
        %v417 = vunpack.c.h.b16 %v340
        %v418 = vunpack.c.l.b16 %v341
        %v419 = vunpack.c.h.b16 %v341
        %v420 = vunpack.c.l.b16 %v342
        %v421 = vunpack.c.h.b16 %v342
        %v422 = vunpack.c.l.b16 %v343
        %v423 = vunpack.c.h.b16 %v343
        %v424 = vpack.c.b16 %v394, %v392
        %v425 = vpack.c.b16 %v395, %v393
        %v426 = vpack.c.b16 %v398, %v396
        %v427 = vpack.c.b16 %v399, %v397
        %v428 = vpack.c.b16 %v402, %v400
        %v429 = vpack.c.b16 %v403, %v401
        %v430 = vpack.c.b16 %v406, %v404
        %v431 = vpack.c.b16 %v407, %v405
        %v432 = vpack.c.b16 %v410, %v408
        %v433 = vpack.c.b16 %v411, %v409
        %v434 = vpack.c.b16 %v414, %v412
        %v435 = vpack.c.b16 %v415, %v413
        %v436 = vpack.c.b16 %v418, %v416
        %v437 = vpack.c.b16 %v419, %v417
        %v438 = vpack.c.b16 %v422, %v420
        %v439 = vpack.c.b16 %v423, %v421
        %v488 = vunpack.c.l.b16 %v344
        %v489 = vunpack.c.l.b16 %v345
        %v490 = vunpack.c.l.b16 %v346
        %v491 = vunpack.c.l.b16 %v347
        %v492 = vunpack.c.l.b16 %v348
        %v493 = vunpack.c.l.b16 %v349
        %v494 = vunpack.c.l.b16 %v350
        %v495 = vunpack.c.l.b16 %v351
        %v496 = vunpack.c.l.b16 %v352
        %v497 = vunpack.c.l.b16 %v353
        %v498 = vunpack.c.l.b16 %v354
        %v499 = vunpack.c.l.b16 %v355
        %v500 = vunpack.c.l.b16 %v356
        %v501 = vunpack.c.l.b16 %v357
        %v502 = vunpack.c.l.b16 %v358
        %v503 = vunpack.c.l.b16 %v359
        %v504 = vunpack.c.l.b16 %v360
        %v505 = vunpack.c.l.b16 %v361
        %v506 = vunpack.c.l.b16 %v362
        %v507 = vunpack.c.l.b16 %v363
        %v508 = vunpack.c.l.b16 %v364
        %v509 = vunpack.c.l.b16 %v365
        %v510 = vunpack.c.l.b16 %v366
        %v511 = vunpack.c.l.b16 %v367
        %v512 = vunpack.c.l.b16 %v368
        %v513 = vunpack.c.l.b16 %v369
        %v514 = vunpack.c.l.b16 %v370
        %v515 = vunpack.c.l.b16 %v371
        %v516 = vunpack.c.l.b16 %v372
        %v517 = vunpack.c.l.b16 %v373
        %v518 = vunpack.c.l.b16 %v374
        %v519 = vunpack.c.l.b16 %v375
        %v520 = vpack.c.b16 %v489, %v488
        %v521 = vpack.c.b16 %v491, %v490
        %v522 = vpack.c.b16 %v493, %v492
        %v523 = vpack.c.b16 %v495, %v494
        %v524 = vpack.c.b16 %v497, %v496
        %v525 = vpack.c.b16 %v499, %v498
        %v526 = vpack.c.b16 %v501, %v500
        %v527 = vpack.c.b16 %v503, %v502
        %v528 = vpack.c.b16 %v505, %v504
        %v529 = vpack.c.b16 %v507, %v506
        %v530 = vpack.c.b16 %v509, %v508
        %v531 = vpack.c.b16 %v511, %v510
        %v532 = vpack.c.b16 %v513, %v512
        %v533 = vpack.c.b16 %v515, %v514
        %v534 = vpack.c.b16 %v517, %v516
        %v535 = vpack.c.b16 %v519, %v518
        %552 = vmatprep.subr.bf16.mxu0 0
        %553 = vmatpush1.bf16.msra.mxu0 %v527
        %554 = vmatprep.subr.bf16.mxu0 0
        %555 = vmatpush1.bf16.msra.mxu0 %v526
        %556 = vmatprep.subr.bf16.mxu0 0
        %557 = vmatpush1.bf16.msra.mxu0 %v525
        %558 = vmatprep.subr.bf16.mxu0 0
        %559 = vmatpush1.bf16.msra.mxu0 %v524
        %560 = vmatprep.subr.bf16.mxu0 0
        %561 = vmatpush1.bf16.msra.mxu0 %v523
        %562 = vmatprep.subr.bf16.mxu0 0
        %563 = vmatpush1.bf16.msra.mxu0 %v522
        %564 = vmatprep.subr.bf16.mxu0 0
        %565 = vmatpush1.bf16.msra.mxu0 %v521
        %566 = vmatprep.subr.bf16.mxu0 0
        %567 = vmatpush1.bf16.msra.mxu0 %v520
        %568 = vmatprep.subr.bf16.mxu0 0
        %569 = vmatpush2.bf16.msra.mxu0 %v535
        %570 = vmatprep.subr.bf16.mxu0 0
        %571 = vmatpush2.bf16.msra.mxu0 %v534
        %572 = vmatprep.subr.bf16.mxu0 0
        %573 = vmatpush2.bf16.msra.mxu0 %v533
        %574 = vmatprep.subr.bf16.mxu0 0
        %575 = vmatpush2.bf16.msra.mxu0 %v532
        %576 = vmatprep.subr.bf16.mxu0 0
        %577 = vmatpush2.bf16.msra.mxu0 %v531
        %578 = vmatprep.subr.bf16.mxu0 0
        %579 = vmatpush2.bf16.msra.mxu0 %v530
        %580 = vmatprep.subr.bf16.mxu0 0
        %581 = vmatpush2.bf16.msra.mxu0 %v529
        %582 = vmatprep.subr.bf16.mxu0 0
        %583 = vmatpush2.bf16.msra.mxu0 %v528
        %584 = vmatprep.mubr.bf16.mxu0 %v425
        %585 = vmatmul.mubr.bf16.gmra.mxu0 %v424
        %v586 = vpop.f32.mrf.mxu0
        %v587 = vadd.f32 0.0, %v586
        %v588 = vpop.f32.mrf.mxu0
        %v589 = vpop.f32.mrf.mxu0
        %v590 = vadd.f32 0.0, %v589
        %v591 = vpop.f32.mrf.mxu0
        %592 = vmatprep.mubr.bf16.mxu0 %v427
        %593 = vmatmul.mubr.bf16.gmra.mxu0 %v426
        %v594 = vpop.f32.mrf.mxu0
        %v595 = vadd.f32 0.0, %v594
        %v596 = vpop.f32.mrf.mxu0
        %v597 = vpop.f32.mrf.mxu0
        %v598 = vadd.f32 0.0, %v597
        %v599 = vpop.f32.mrf.mxu0
        %600 = vmatprep.mubr.bf16.mxu0 %v429
        %601 = vmatmul.mubr.bf16.gmra.mxu0 %v428
        %v602 = vpop.f32.mrf.mxu0
        %v603 = vadd.f32 0.0, %v602
        %v604 = vpop.f32.mrf.mxu0
        %v605 = vpop.f32.mrf.mxu0
        %v606 = vadd.f32 0.0, %v605
        %v607 = vpop.f32.mrf.mxu0
        %608 = vmatprep.mubr.bf16.mxu0 %v431
        %609 = vmatmul.mubr.bf16.gmra.mxu0 %v430
        %v610 = vpop.f32.mrf.mxu0
        %v611 = vadd.f32 0.0, %v610
        %v612 = vpop.f32.mrf.mxu0
        %v613 = vpop.f32.mrf.mxu0
        %v614 = vadd.f32 0.0, %v613
        %v615 = vpop.f32.mrf.mxu0
        %616 = vmatprep.mubr.bf16.mxu0 %v433
        %617 = vmatmul.mubr.bf16.gmra.mxu0 %v432
        %v618 = vpop.f32.mrf.mxu0
        %v619 = vadd.f32 0.0, %v618
        %v620 = vpop.f32.mrf.mxu0
        %v621 = vpop.f32.mrf.mxu0
        %v622 = vadd.f32 0.0, %v621
        %v623 = vpop.f32.mrf.mxu0
        %624 = vmatprep.mubr.bf16.mxu0 %v435
        %625 = vmatmul.mubr.bf16.gmra.mxu0 %v434
        %v626 = vpop.f32.mrf.mxu0
        %v627 = vadd.f32 0.0, %v626
        %v628 = vpop.f32.mrf.mxu0
        %v629 = vpop.f32.mrf.mxu0
        %v630 = vadd.f32 0.0, %v629
        %v631 = vpop.f32.mrf.mxu0
        %632 = vmatprep.mubr.bf16.mxu0 %v437
        %633 = vmatmul.mubr.bf16.gmra.mxu0 %v436
        %v634 = vpop.f32.mrf.mxu0
        %v635 = vadd.f32 0.0, %v634
        %v636 = vpop.f32.mrf.mxu0
        %v637 = vpop.f32.mrf.mxu0
        %v638 = vadd.f32 0.0, %v637
        %v639 = vpop.f32.mrf.mxu0
        %640 = vmatprep.mubr.bf16.mxu0 %v439
        %641 = vmatmul.mubr.bf16.gmra.mxu0 %v438
        %v642 = vpop.f32.mrf.mxu0
        %v643 = vadd.f32 0.0, %v642
        %v644 = vpop.f32.mrf.mxu0
        %v645 = vpop.f32.mrf.mxu0
        %v646 = vadd.f32 0.0, %v645
        %v647 = vpop.f32.mrf.mxu0
        %648 = vdwg.mxu0
        %v649 = vadd.f32 %v312, %v587
        %v650 = vadd.f32 %v313, %v590
        %v651 = vadd.f32 %v314, %v595
        %v652 = vadd.f32 %v315, %v598
        %v653 = vadd.f32 %v316, %v603
        %v654 = vadd.f32 %v317, %v606
        %v655 = vadd.f32 %v318, %v611
        %v656 = vadd.f32 %v319, %v614
        %v657 = vadd.f32 %v320, %v619
        %v658 = vadd.f32 %v321, %v622
        %v659 = vadd.f32 %v322, %v627
        %v660 = vadd.f32 %v323, %v630
        %v661 = vadd.f32 %v324, %v635
        %v662 = vadd.f32 %v325, %v638
        %v663 = vadd.f32 %v326, %v643
        %v664 = vadd.f32 %v327, %v646
        %665 = vst [vmem:[#allocation2] sm:$0xff] %v649
        %666 = vst [vmem:[#allocation2 + $0x8] sm:$0xff] %v650
        %667 = vst [vmem:[#allocation2 + $0x10] sm:$0xff] %v651
        %668 = vst [vmem:[#allocation2 + $0x18] sm:$0xff] %v652
        %669 = vst [vmem:[#allocation2 + $0x20] sm:$0xff] %v653
        %670 = vst [vmem:[#allocation2 + $0x28] sm:$0xff] %v654
        %671 = vst [vmem:[#allocation2 + $0x30] sm:$0xff] %v655
        %672 = vst [vmem:[#allocation2 + $0x38] sm:$0xff] %v656
        %673 = vst [vmem:[#allocation2 + $0x40] sm:$0xff] %v657
        %674 = vst [vmem:[#allocation2 + $0x48] sm:$0xff] %v658
        %675 = vst [vmem:[#allocation2 + $0x50] sm:$0xff] %v659
        %676 = vst [vmem:[#allocation2 + $0x58] sm:$0xff] %v660
        %677 = vst [vmem:[#allocation2 + $0x60] sm:$0xff] %v661
        %678 = vst [vmem:[#allocation2 + $0x68] sm:$0xff] %v662
        %679 = vst [vmem:[#allocation2 + $0x70] sm:$0xff] %v663
        %680 = vst [vmem:[#allocation2 + $0x78] sm:$0xff] %v664
        %p681 = scmp.eq.s32.totalorder %s29, 1
        // Predicated region
        $region53: #{tpu_custom_call.1} parent=35 // pred_check
          %p682 = pneg %p681
        $region54: #{tpu_custom_call.1} parent=35 // pred_check_branch
          %684 = sbr.rel (%p682) target = $region56
        $region55: #{tpu_custom_call.1} parent=35 // pred_region
          %v685 = vld [vmem:[#allocation2] sm:$0xff]
          %v686 = vld [vmem:[#allocation2 + $0x8] sm:$0xff]
          %v687 = vld [vmem:[#allocation2 + $0x10] sm:$0xff]
          %v688 = vld [vmem:[#allocation2 + $0x18] sm:$0xff]
          %v689 = vld [vmem:[#allocation2 + $0x20] sm:$0xff]
          %v690 = vld [vmem:[#allocation2 + $0x28] sm:$0xff]
          %v691 = vld [vmem:[#allocation2 + $0x30] sm:$0xff]
          %v692 = vld [vmem:[#allocation2 + $0x38] sm:$0xff]
          %v693 = vld [vmem:[#allocation2 + $0x40] sm:$0xff]
          %v694 = vld [vmem:[#allocation2 + $0x48] sm:$0xff]
          %v695 = vld [vmem:[#allocation2 + $0x50] sm:$0xff]
          %v696 = vld [vmem:[#allocation2 + $0x58] sm:$0xff]
          %v697 = vld [vmem:[#allocation2 + $0x60] sm:$0xff]
          %v698 = vld [vmem:[#allocation2 + $0x68] sm:$0xff]
          %v699 = vld [vmem:[#allocation2 + $0x70] sm:$0xff]
          %v700 = vld [vmem:[#allocation2 + $0x78] sm:$0xff]
          %v701 = vpack.c.bf16 %v686, %v685
          %v702 = vpack.c.bf16 %v688, %v687
          %v703 = vpack.c.bf16 %v690, %v689
          %v704 = vpack.c.bf16 %v692, %v691
          %v705 = vpack.c.bf16 %v694, %v693
          %v706 = vpack.c.bf16 %v696, %v695
          %v707 = vpack.c.bf16 %v698, %v697
          %v708 = vpack.c.bf16 %v700, %v699
          %v709 = vld [vmem:[#allocation8] sm:$0xf]
          %v710 = vld [vmem:[#allocation8 + $0x4] sm:$0xf]
          %v711 = vld [vmem:[#allocation8 + $0x8] sm:$0xf]
          %v712 = vld [vmem:[#allocation8 + $0xc] sm:$0xf]
          %v713 = vld [vmem:[#allocation8 + $0x10] sm:$0xf]
          %v714 = vld [vmem:[#allocation8 + $0x14] sm:$0xf]
          %v715 = vld [vmem:[#allocation8 + $0x18] sm:$0xf]
          %v716 = vld [vmem:[#allocation8 + $0x1c] sm:$0xf]
          %v717 = vld [vmem:[#allocation8 + $0x20] sm:$0xf]
          %v718 = vld [vmem:[#allocation8 + $0x24] sm:$0xf]
          %v719 = vld [vmem:[#allocation8 + $0x28] sm:$0xf]
          %v720 = vld [vmem:[#allocation8 + $0x2c] sm:$0xf]
          %v721 = vld [vmem:[#allocation8 + $0x30] sm:$0xf]
          %v722 = vld [vmem:[#allocation8 + $0x34] sm:$0xf]
          %v723 = vld [vmem:[#allocation8 + $0x38] sm:$0xf]
          %v724 = vld [vmem:[#allocation8 + $0x3c] sm:$0xf]
          %v725 = vld [vmem:[%s3] sm:$0x1]
          %v727 = vlaneseq
          %v728 = vshrl.u32 %v727, 7
          %v729 = vsub.s32 0, %v728
          %v730 = vrot.slane %v725, %v729
          %v748 = vunpack.c.l.b16 %v709
          %v749 = vunpack.c.l.b16 %v710
          %v750 = vunpack.c.l.b16 %v711
          %v751 = vunpack.c.l.b16 %v712
          %v752 = vunpack.c.l.b16 %v713
          %v753 = vunpack.c.l.b16 %v714
          %v754 = vunpack.c.l.b16 %v715
          %v755 = vunpack.c.l.b16 %v716
          %v756 = vunpack.c.l.b16 %v717
          %v757 = vunpack.c.l.b16 %v718
          %v758 = vunpack.c.l.b16 %v719
          %v759 = vunpack.c.l.b16 %v720
          %v760 = vunpack.c.l.b16 %v721
          %v761 = vunpack.c.l.b16 %v722
          %v762 = vunpack.c.l.b16 %v723
          %v763 = vunpack.c.l.b16 %v724
          %v764 = vpack.c.b16 %v749, %v748
          %v765 = vpack.c.b16 %v751, %v750
          %v766 = vpack.c.b16 %v753, %v752
          %v767 = vpack.c.b16 %v755, %v754
          %v768 = vpack.c.b16 %v757, %v756
          %v769 = vpack.c.b16 %v759, %v758
          %v770 = vpack.c.b16 %v761, %v760
          %v771 = vpack.c.b16 %v763, %v762
          %780 = vmatprep.subr.bf16.mxu0 0
          %781 = vmatpush1.bf16.msra.mxu0 %v771
          %782 = vmatprep.subr.bf16.mxu0 0
          %783 = vmatpush1.bf16.msra.mxu0 %v770
          %784 = vmatprep.subr.bf16.mxu0 0
          %785 = vmatpush1.bf16.msra.mxu0 %v769
          %786 = vmatprep.subr.bf16.mxu0 0
          %787 = vmatpush1.bf16.msra.mxu0 %v768
          %788 = vmatprep.subr.bf16.mxu0 0
          %789 = vmatpush1.bf16.msra.mxu0 %v767
          %790 = vmatprep.subr.bf16.mxu0 0
          %791 = vmatpush1.bf16.msra.mxu0 %v766
          %792 = vmatprep.subr.bf16.mxu0 0
          %793 = vmatpush1.bf16.msra.mxu0 %v765
          %794 = vmatprep.subr.bf16.mxu0 0
          %795 = vmatpush1.bf16.msra.mxu0 %v764
          %796 = vmatprep.subr.bf16.mxu0 0
          %797 = vmatpush2.bf16.msra.mxu0 0
          %798 = vmatprep.subr.bf16.mxu0 0
          %799 = vmatpush2.bf16.msra.mxu0 0
          %800 = vmatprep.subr.bf16.mxu0 0
          %801 = vmatpush2.bf16.msra.mxu0 0
          %802 = vmatprep.subr.bf16.mxu0 0
          %803 = vmatpush2.bf16.msra.mxu0 0
          %804 = vmatprep.subr.bf16.mxu0 0
          %805 = vmatpush2.bf16.msra.mxu0 0
          %806 = vmatprep.subr.bf16.mxu0 0
          %807 = vmatpush2.bf16.msra.mxu0 0
          %808 = vmatprep.subr.bf16.mxu0 0
          %809 = vmatpush2.bf16.msra.mxu0 0
          %810 = vmatprep.subr.bf16.mxu0 0
          %811 = vmatpush2.bf16.msra.mxu0 0
          %812 = vmatprep.mubr.bf16.mxu0 0
          %813 = vmatmul.mubr.bf16.gmra.mxu0 %v701
          %v814 = vpop.f32.mrf.mxu0
          %v815 = vadd.f32 %v730, %v814
          %v816 = vpop.f32.mrf.mxu0
          %v817 = vpop.f32.mrf.mxu0
          %v818 = vadd.f32 %v730, %v817
          %v819 = vpop.f32.mrf.mxu0
          %820 = vmatprep.mubr.bf16.mxu0 0
          %821 = vmatmul.mubr.bf16.gmra.mxu0 %v702
          %v822 = vpop.f32.mrf.mxu0
          %v823 = vadd.f32 %v730, %v822
          %v824 = vpop.f32.mrf.mxu0
          %v825 = vpop.f32.mrf.mxu0
          %v826 = vadd.f32 %v730, %v825
          %v827 = vpop.f32.mrf.mxu0
          %828 = vmatprep.mubr.bf16.mxu0 0
          %829 = vmatmul.mubr.bf16.gmra.mxu0 %v703
          %v830 = vpop.f32.mrf.mxu0
          %v831 = vadd.f32 %v730, %v830
          %v832 = vpop.f32.mrf.mxu0
          %v833 = vpop.f32.mrf.mxu0
          %v834 = vadd.f32 %v730, %v833
          %v835 = vpop.f32.mrf.mxu0
          %836 = vmatprep.mubr.bf16.mxu0 0
          %837 = vmatmul.mubr.bf16.gmra.mxu0 %v704
          %v838 = vpop.f32.mrf.mxu0
          %v839 = vadd.f32 %v730, %v838
          %v840 = vpop.f32.mrf.mxu0
          %v841 = vpop.f32.mrf.mxu0
          %v842 = vadd.f32 %v730, %v841
          %v843 = vpop.f32.mrf.mxu0
          %844 = vmatprep.mubr.bf16.mxu0 0
          %845 = vmatmul.mubr.bf16.gmra.mxu0 %v705
          %v846 = vpop.f32.mrf.mxu0
          %v847 = vadd.f32 %v730, %v846
          %v848 = vpop.f32.mrf.mxu0
          %v849 = vpop.f32.mrf.mxu0
          %v850 = vadd.f32 %v730, %v849
          %v851 = vpop.f32.mrf.mxu0
          %852 = vmatprep.mubr.bf16.mxu0 0
          %853 = vmatmul.mubr.bf16.gmra.mxu0 %v706
          %v854 = vpop.f32.mrf.mxu0
          %v855 = vadd.f32 %v730, %v854
          %v856 = vpop.f32.mrf.mxu0
          %v857 = vpop.f32.mrf.mxu0
          %v858 = vadd.f32 %v730, %v857
          %v859 = vpop.f32.mrf.mxu0
          %860 = vmatprep.mubr.bf16.mxu0 0
          %861 = vmatmul.mubr.bf16.gmra.mxu0 %v707
          %v862 = vpop.f32.mrf.mxu0
          %v863 = vadd.f32 %v730, %v862
          %v864 = vpop.f32.mrf.mxu0
          %v865 = vpop.f32.mrf.mxu0
          %v866 = vadd.f32 %v730, %v865
          %v867 = vpop.f32.mrf.mxu0
          %868 = vmatprep.mubr.bf16.mxu0 0
          %869 = vmatmul.mubr.bf16.gmra.mxu0 %v708
          %v870 = vpop.f32.mrf.mxu0
          %v871 = vadd.f32 %v730, %v870
          %v872 = vpop.f32.mrf.mxu0
          %v873 = vpop.f32.mrf.mxu0
          %v874 = vadd.f32 %v730, %v873
          %v875 = vpop.f32.mrf.mxu0
          %876 = vdwg.mxu0
          %877 = vst [vmem:[%s286] sm:$0xff] %v815
          %878 = vst [vmem:[%s286 + $0x8] sm:$0xff] %v818
          %879 = vst [vmem:[%s286 + $0x10] sm:$0xff] %v823
          %880 = vst [vmem:[%s286 + $0x18] sm:$0xff] %v826
          %881 = vst [vmem:[%s286 + $0x20] sm:$0xff] %v831
          %882 = vst [vmem:[%s286 + $0x28] sm:$0xff] %v834
          %883 = vst [vmem:[%s286 + $0x30] sm:$0xff] %v839
          %884 = vst [vmem:[%s286 + $0x38] sm:$0xff] %v842
          %885 = vst [vmem:[%s286 + $0x40] sm:$0xff] %v847
          %886 = vst [vmem:[%s286 + $0x48] sm:$0xff] %v850
          %887 = vst [vmem:[%s286 + $0x50] sm:$0xff] %v855
          %888 = vst [vmem:[%s286 + $0x58] sm:$0xff] %v858
          %889 = vst [vmem:[%s286 + $0x60] sm:$0xff] %v863
          %890 = vst [vmem:[%s286 + $0x68] sm:$0xff] %v866
          %891 = vst [vmem:[%s286 + $0x70] sm:$0xff] %v871
          %892 = vst [vmem:[%s286 + $0x78] sm:$0xff] %v874
        $region56: #{tpu_custom_call.1} parent=35 // pred_fallthru
          _
        %s893 = sand.u32 %s140, 1
        %s894 = scalar_lea.sflag [#allocation5], %s893
        %s895 = sand.u32 %s140, 1
        %s896 = smul.addr %s895, 128
        %s897 = scalar_lea.vmem [#allocation9], %s896
        // Predicated region
        $region57: #{tpu_custom_call.1} parent=35 // pred_check
          %p898 = pneg %p150
        $region58: #{tpu_custom_call.1} parent=35 // pred_check_branch
          %900 = sbr.rel (%p898) target = $region60
        $region59: #{tpu_custom_call.1} parent=35 // pred_region
          %s901 = smul.u32 16, %s28
          %s903 = ssub.s32 2048, 2048
          %904 = vsyncadd %s894, %s903
          %s905 = smul.addr %s901, 128
          %s906 = scalar_lea.hbm %s4, %s905
          %s907 = sshll.u32 %s897, 4
          %s908 = int_to_ptr.vmem [resolvable:$true] %s907
          %913 = dma.vmem_to_hbm [thread:$0]  %s908, 2048, %s906, %s894, 128, 128, 8
        $region60: #{tpu_custom_call.1} parent=35 // pred_fallthru
          _
      $region36: #{tpu_custom_call.1} parent=5 // pred_fallthru
        _
      %p914 = scmp.le.s32.totalorder 2, %s19
      // Predicated region
      $region61: #{tpu_custom_call.1} parent=5 // pred_check
        %p915 = pneg %p914
      $region62: #{tpu_custom_call.1} parent=5 // pred_check_branch
        %917 = sbr.rel (%p915) target = $region64
      $region63: #{tpu_custom_call.1} parent=5 // pred_region
        %s918 = ssub.s32 %s19, 2
        // Predicated region
        $region65: #{tpu_custom_call.1} parent=63 // pred_check
          %p919 = pneg %p156
        $region66: #{tpu_custom_call.1} parent=63 // pred_check_branch
          %921 = sbr.rel (%p919) target = $region68
        $region67: #{tpu_custom_call.1} parent=63 // pred_region
          %s922 = sand.u32 %s141, 1
          %s923 = scalar_lea.sflag [#allocation5], %s922
          %s924 = sand.u32 %s141, 1
          %s925 = smul.addr %s924, 128
          %s926 = scalar_lea.vmem [#allocation9], %s925
          %927 = dma.done %s923, 2048
        $region68: #{tpu_custom_call.1} parent=63 // pred_fallthru
          _
      $region64: #{tpu_custom_call.1} parent=5 // pred_fallthru
        _
    $region6: #{tpu_custom_call.1} parent=1 // loop_footer
      %s23 = sadd.s32 1, %s19
    $region7: #{tpu_custom_call.1} parent=1 // loop_footer_branch
      %18 = sbr.rel target = $region3
    $region8: #{tpu_custom_call.1} parent=1 // loop_exit
      _
    %928 = vsyncpa [#allocation4], 1
    %s929 = scalar_lea.sflag [#allocation4], 1
    %930 = vsyncpa %s929, 1
    %931 = vsyncpa [#allocation7], 1
    %s932 = scalar_lea.sflag [#allocation7], 1
    %933 = vsyncpa %s932, 1
    %934 = vsyncpa [#allocation5], 1
    %s935 = scalar_lea.sflag [#allocation5], 1
    %936 = vsyncpa %s935, 1

// kernel: tpu_custom_call.1
$region0: #{tpu_custom_call.1}
  #allocation0 [shape = 'u32[]', space=smem, size = 0x4, offset = 0x4, fixed_abs, tag = 'smem constant byte address 0x4 - core index']
  #allocation1 [shape = 'u32[144,128]{1,0:T(1,128)}', space=vmem, size = 0x12000, scoped, tag = 'internal scratch']
  #allocation2 [shape = 'f32[128,128]{1,0:T(8,128)}', space=vmem, size = 0x10000, scoped, tag = 'scratch operand']
  %s0 = inlined_call_operand.hbm [shape: bf16[512,512], index: 0, kind: input, shape index: {}]
  %s1 = inlined_call_operand.hbm [shape: bf16[512,128], index: 1, kind: input, shape index: {}]
  %s2 = inlined_call_operand.hbm [shape: bf16[128,128], index: 2, kind: input, shape index: {}]
  %s3 = inlined_call_operand.vmem [shape: f32[1,128], index: 3, kind: input, shape index: {}]
  %s4 = inlined_call_operand.hbm [shape: f32[512,128], index: 4, kind: output, shape index: {}]
  %s5 = sld [smem:[#allocation0]]
  $region69: #{tpu_custom_call.1} parent=0
    _
  %s7 = ssub.s32 1, %s5
  %s8 = scalar_select 0, %s7, %s5
  $region1: #{tpu_custom_call.1} parent=0
    #allocation3 [shape = 'u8[131072]{0}', space=vmem, size = 0x20000, scoped, tag = 'input window, operand 0']
    #allocation4 [shape = 's32[2]{0}', space=sflag, size = 0x8, scoped, tag = 'scoped memory for tpu_custom_call.1']
    #allocation5 [shape = 's32[2]{0}', space=sflag, size = 0x8, scoped, tag = 'scoped memory for tpu_custom_call.1']
    #allocation6 [shape = 'u8[131072]{0}', space=vmem, size = 0x20000, scoped, tag = 'input window, operand 1']
    #allocation7 [shape = 's32[2]{0}', space=sflag, size = 0x8, scoped, tag = 'scoped memory for tpu_custom_call.1']
    #allocation8 [shape = 'u8[32768]{0}', space=vmem, size = 0x8000, scoped, tag = 'input window, operand 2, single buffered']
    #allocation9 [shape = 'u8[131072]{0}', space=vmem, size = 0x20000, scoped, tag = 'output window, operand 0']
    %9 = vsyncpa [#allocation4], 0
    %s10 = scalar_lea.sflag [#allocation4], 1
    %11 = vsyncpa %s10, 0
    %12 = vsyncpa [#allocation7], 0
    %s13 = scalar_lea.sflag [#allocation7], 1
    %14 = vsyncpa %s13, 0
    %15 = vsyncpa [#allocation5], 0
    %s16 = scalar_lea.sflag [#allocation5], 1
    %17 = vsyncpa %s16, 0
    loop: start=0, step=1, limit=10
    $region2: #{tpu_custom_call.1} parent=1 // loop_pre_header
      _
    $region3: #{tpu_custom_call.1} parent=1 // loop_header
      %s19 = sphi 0, %s23
      %p20 = scmp.ge.s32.totalorder %s19, 10
      %s26 = sphi 0, %s38
      %s27 = sphi 0, %s34
      %s28 = sphi 0, %s26
      %s29 = sphi 0, %s27
      %s30 = sphi 0, %s28
      %s31 = sphi 0, %s29
      %s43 = sphi 0, %s45
      %s46 = sphi 0, %s43
      %s47 = sphi 0, %s46
      %s63 = sphi 0, %s47
      %s69 = sphi 0, %s71
      %s72 = sphi 0, %s69
      %s73 = sphi 0, %s72
      %s89 = sphi 0, %s73
      %s93 = sphi 0, %s93
      %s95 = sphi 0, %s93
      %s96 = sphi 0, %s95
      %s110 = sphi 0, %s96
      %s114 = sphi 0, %s114
      %s116 = sphi 0, %s114
      %s117 = sphi 0, %s116
      %s131 = sphi 0, %s117
      %s137 = sphi 0, %s139
      %s140 = sphi 0, %s137
      %s141 = sphi 0, %s140
      %s157 = sphi 0, %s141
    $region4: #{tpu_custom_call.1} parent=1 // loop_header_branch
      %22 = sbr.rel (%p20) target = $region8
    $region5: #{tpu_custom_call.1} parent=1 // loop_body
      %s24 = ssub.s32 %s19, 1
      %s25 = ssub.s32 %s19, 2
      %s32 = sadd.s32 1, %s27
      %p33 = scmp.ge.s32.totalorder %s32, 2
      %s34 = scalar_select %p33, 0, %s32
      %s35 = sadd.s32 1, %s26
      %s36 = scalar_select %p33, %s35, %s26
      %p37 = scmp.ge.s32.totalorder %s36, 4
      %s38 = scalar_select %p37, 0, %s36
      %s39 = ssub.s32 %s26, %s38
      %s40 = ssub.s32 %s27, %s34
      %s41 = sor.u32 %s39, %s40
      %p42 = scmp.eq.s32.totalorder %s41, 0
      %s44 = sadd.s32 %s43, 1
      %s45 = scalar_select %p42, %s43, %s44
      %p48 = pneg %p42
      %p49 = scmp.eq.s32.totalorder %s19, 7
      %p50 = por %p48, %p49
      %p51 = scmp.ne.s32.totalorder %s43, %s46
      %p52 = scmp.eq.s32.totalorder %s19, 0
      %p53 = por %p51, %p52
      %p54 = scmp.ne.s32.totalorder %s43, %s46
      %p55 = scmp.eq.s32.totalorder %s24, 7
      %p56 = por %p54, %p55
      %p57 = scmp.ne.s32.totalorder %s46, %s47
      %p58 = scmp.eq.s32.totalorder %s24, 0
      %p59 = por %p57, %p58
      %p60 = scmp.ne.s32.totalorder %s46, %s47
      %p61 = scmp.eq.s32.totalorder %s25, 7
      %p62 = por %p60, %p61
      %p64 = scmp.ne.s32.totalorder %s47, %s63
      %p65 = scmp.eq.s32.totalorder %s25, 0
      %p66 = por %p64, %p65
      %s67 = ssub.s32 %s27, %s34
      %p68 = scmp.eq.s32.totalorder %s67, 0
      %s70 = sadd.s32 %s69, 1
      %s71 = scalar_select %p68, %s69, %s70
      %p74 = pneg %p68
      %p75 = scmp.eq.s32.totalorder %s19, 7
      %p76 = por %p74, %p75
      %p77 = scmp.ne.s32.totalorder %s69, %s72
      %p78 = scmp.eq.s32.totalorder %s19, 0
      %p79 = por %p77, %p78
      %p80 = scmp.ne.s32.totalorder %s69, %s72
      %p81 = scmp.eq.s32.totalorder %s24, 7
      %p82 = por %p80, %p81
      %p83 = scmp.ne.s32.totalorder %s72, %s73
      %p84 = scmp.eq.s32.totalorder %s24, 0
      %p85 = por %p83, %p84
      %p86 = scmp.ne.s32.totalorder %s72, %s73
      %p87 = scmp.eq.s32.totalorder %s25, 7
      %p88 = por %p86, %p87
      %p90 = scmp.ne.s32.totalorder %s73, %s89
      %p91 = scmp.eq.s32.totalorder %s25, 0
      %p92 = por %p90, %p91
      %s94 = sadd.s32 %s93, 1
      %p97 = scmp.eq.s32.totalorder %s19, 7
      %p98 = scmp.ne.s32.totalorder %s93, %s95
      %p99 = scmp.eq.s32.totalorder %s19, 0
      %p100 = por %p98, %p99
      %p101 = scmp.ne.s32.totalorder %s93, %s95
      %p102 = scmp.eq.s32.totalorder %s24, 7
      %p103 = por %p101, %p102
      %p104 = scmp.ne.s32.totalorder %s95, %s96
      %p105 = scmp.eq.s32.totalorder %s24, 0
      %p106 = por %p104, %p105
      %p107 = scmp.ne.s32.totalorder %s95, %s96
      %p108 = scmp.eq.s32.totalorder %s25, 7
      %p109 = por %p107, %p108
      %p111 = scmp.ne.s32.totalorder %s96, %s110
      %p112 = scmp.eq.s32.totalorder %s25, 0
      %p113 = por %p111, %p112
      %s115 = sadd.s32 %s114, 1
      %p118 = scmp.eq.s32.totalorder %s19, 7
      %p119 = scmp.ne.s32.totalorder %s114, %s116
      %p120 = scmp.eq.s32.totalorder %s19, 0
      %p121 = por %p119, %p120
      %p122 = scmp.ne.s32.totalorder %s114, %s116
      %p123 = scmp.eq.s32.totalorder %s24, 7
      %p124 = por %p122, %p123
      %p125 = scmp.ne.s32.totalorder %s116, %s117
      %p126 = scmp.eq.s32.totalorder %s24, 0
      %p127 = por %p125, %p126
      %p128 = scmp.ne.s32.totalorder %s116, %s117
      %p129 = scmp.eq.s32.totalorder %s25, 7
      %p130 = por %p128, %p129
      %p132 = scmp.ne.s32.totalorder %s117, %s131
      %p133 = scmp.eq.s32.totalorder %s25, 0
      %p134 = por %p132, %p133
      %s135 = ssub.s32 %s26, %s38
      %p136 = scmp.eq.s32.totalorder %s135, 0
      %s138 = sadd.s32 %s137, 1
      %s139 = scalar_select %p136, %s137, %s138
      %p142 = pneg %p136
      %p143 = scmp.eq.s32.totalorder %s19, 7
      %p144 = por %p142, %p143
      %p145 = scmp.ne.s32.totalorder %s137, %s140
      %p146 = scmp.eq.s32.totalorder %s19, 0
      %p147 = por %p145, %p146
      %p148 = scmp.ne.s32.totalorder %s137, %s140
      %p149 = scmp.eq.s32.totalorder %s24, 7
      %p150 = por %p148, %p149
      %p151 = scmp.ne.s32.totalorder %s140, %s141
      %p152 = scmp.eq.s32.totalorder %s24, 0
      %p153 = por %p151, %p152
      %p154 = scmp.ne.s32.totalorder %s140, %s141
      %p155 = scmp.eq.s32.totalorder %s25, 7
      %p156 = por %p154, %p155
      %p158 = scmp.ne.s32.totalorder %s141, %s157
      %p159 = scmp.eq.s32.totalorder %s25, 0
      %p160 = por %p158, %p159
      %p161 = scmp.le.s32.totalorder 1, %s19
      %p162 = scmp.lt.s32.totalorder %s19, 9
      %p163 = pnand %p161, %p162
      %p164 = pneg %p163
      // Predicated region
      $region9: #{tpu_custom_call.1} parent=5 // pred_check
        _
      $region10: #{tpu_custom_call.1} parent=5 // pred_check_branch
        %166 = sbr.rel (%p163) target = $region12
      $region11: #{tpu_custom_call.1} parent=5 // pred_region
        %s167 = ssub.s32 %s19, 1
        // Predicated region
        $region13: #{tpu_custom_call.1} parent=11 // pred_check
          %p168 = pneg %p106
        $region14: #{tpu_custom_call.1} parent=11 // pred_check_branch
          %170 = sbr.rel (%p168) target = $region16
        $region15: #{tpu_custom_call.1} parent=11 // pred_region
          %s172 = ssub.s32 1024, 1024
          %173 = vsyncadd [#allocation7], %s172
          %s174 = sshll.u32 [#allocation8], 4
          %s175 = int_to_ptr.vmem [resolvable:$true] %s174
          %180 = dma.hbm_to_vmem [thread:$0]  %s2, 1024, %s175, [#allocation7], 64, 64, 4
        $region16: #{tpu_custom_call.1} parent=11 // pred_fallthru
          _
        // Predicated region
        $region17: #{tpu_custom_call.1} parent=11 // pred_check
          %p181 = pneg %p127
        $region18: #{tpu_custom_call.1} parent=11 // pred_check_branch
          %183 = sbr.rel (%p181) target = $region20
        $region19: #{tpu_custom_call.1} parent=11 // pred_region
          _
        $region20: #{tpu_custom_call.1} parent=11 // pred_fallthru
          _
      $region12: #{tpu_custom_call.1} parent=5 // pred_fallthru
        _
      %p184 = scmp.lt.s32.totalorder %s19, 8
      // Predicated region
      $region21: #{tpu_custom_call.1} parent=5 // pred_check
        %p185 = pneg %p184
      $region22: #{tpu_custom_call.1} parent=5 // pred_check_branch
        %187 = sbr.rel (%p185) target = $region24
      $region23: #{tpu_custom_call.1} parent=5 // pred_region
        // Predicated region
        $region25: #{tpu_custom_call.1} parent=23 // pred_check
          %p188 = pneg %p53
        $region26: #{tpu_custom_call.1} parent=23 // pred_check_branch
          %190 = sbr.rel (%p188) target = $region28
        $region27: #{tpu_custom_call.1} parent=23 // pred_region
          %s191 = sand.u32 %s43, 1
          %s192 = scalar_lea.sflag [#allocation4], %s191
          %s193 = sand.u32 %s43, 1
          %s194 = smul.addr %s193, 128
          %s195 = scalar_lea.vmem [#allocation3], %s194
          %s196 = smul.u32 16, %s26
          %s197 = smul.u32 2, %s27
          %s199 = ssub.s32 2048, 2048
          %200 = vsyncadd %s192, %s199
          %s201 = smul.addr %s196, 4
          %s202 = sadd.s32 %s197, %s201
          %s203 = smul.addr %s202, 64
          %s204 = scalar_lea.hbm %s0, %s203
          %s205 = sshll.u32 %s195, 4
          %s206 = int_to_ptr.vmem [resolvable:$true] %s205
          %211 = dma.hbm_to_vmem [thread:$0]  %s204, 2048, %s206, %s192, 256, 128, 8
        $region28: #{tpu_custom_call.1} parent=23 // pred_fallthru
          _
        // Predicated region
        $region29: #{tpu_custom_call.1} parent=23 // pred_check
          %p212 = pneg %p79
        $region30: #{tpu_custom_call.1} parent=23 // pred_check_branch
          %214 = sbr.rel (%p212) target = $region32
        $region31: #{tpu_custom_call.1} parent=23 // pred_region
          %s215 = sand.u32 %s19, 1
          %s216 = scalar_lea.sflag [#allocation7], %s215
          %s217 = sand.u32 %s69, 1
          %s218 = smul.addr %s217, 128
          %s219 = scalar_lea.vmem [#allocation6], %s218
          %s220 = smul.u32 32, %s27
          %s222 = ssub.s32 2048, 2048
          %223 = vsyncadd %s216, %s222
          %s224 = smul.addr %s220, 64
          %s225 = scalar_lea.hbm %s1, %s224
          %s226 = sshll.u32 %s219, 4
          %s227 = int_to_ptr.vmem [resolvable:$true] %s226
          %232 = dma.hbm_to_vmem [thread:$0]  %s225, 2048, %s227, %s216, 64, 64, 4
        $region32: #{tpu_custom_call.1} parent=23 // pred_fallthru
          _
      $region24: #{tpu_custom_call.1} parent=5 // pred_fallthru
        _
      %p233 = scmp.le.s32.totalorder 1, %s19
      %p234 = scmp.lt.s32.totalorder %s19, 9
      %p235 = pnand %p233, %p234
      %p236 = pneg %p235
      // Predicated region
      $region33: #{tpu_custom_call.1} parent=5 // pred_check
        _
      $region34: #{tpu_custom_call.1} parent=5 // pred_check_branch
        %238 = sbr.rel (%p235) target = $region36
      $region35: #{tpu_custom_call.1} parent=5 // pred_region
        %s239 = ssub.s32 %s19, 1
        %s240 = sand.u32 %s46, 1
        %s241 = scalar_lea.sflag [#allocation4], %s240
        %s242 = sand.u32 %s46, 1
        %s243 = smul.addr %s242, 128
        %s244 = scalar_lea.vmem [#allocation3], %s243
        // Predicated region
        $region37: #{tpu_custom_call.1} parent=35 // pred_check
          %p245 = pneg %p59
        $region38: #{tpu_custom_call.1} parent=35 // pred_check_branch
          %247 = sbr.rel (%p245) target = $region40
        $region39: #{tpu_custom_call.1} parent=35 // pred_region
          %248 = dma.done %s241, 2048
        $region40: #{tpu_custom_call.1} parent=35 // pred_fallthru
          _
        %s249 = sand.u32 %s24, 1
        %s250 = scalar_lea.sflag [#allocation7], %s249
        %s251 = sand.u32 %s72, 1
        %s252 = smul.addr %s251, 128
        %s253 = scalar_lea.vmem [#allocation6], %s252
        // Predicated region
        $region41: #{tpu_custom_call.1} parent=35 // pred_check
          %p254 = pneg %p85
        $region42: #{tpu_custom_call.1} parent=35 // pred_check_branch
          %256 = sbr.rel (%p254) target = $region44
        $region43: #{tpu_custom_call.1} parent=35 // pred_region
          %257 = dma.done %s250, 2048
        $region44: #{tpu_custom_call.1} parent=35 // pred_fallthru
          _
        // Predicated region
        $region45: #{tpu_custom_call.1} parent=35 // pred_check
          %p258 = pneg %p106
        $region46: #{tpu_custom_call.1} parent=35 // pred_check_branch
          %260 = sbr.rel (%p258) target = $region48
        $region47: #{tpu_custom_call.1} parent=35 // pred_region
          %261 = dma.done [#allocation7], 1024
        $region48: #{tpu_custom_call.1} parent=35 // pred_fallthru
          _
        %s262 = sand.u32 %s46, 1
        %s263 = scalar_lea.sflag [#allocation4], %s262
        %s264 = sand.u32 %s46, 1
        %s265 = smul.addr %s264, 128
        %s266 = scalar_lea.vmem [#allocation3], %s265
        %p267 = pneg %p59
        %p268 = pneg %p56
        %s269 = sand.u32 %s24, 1
        %s270 = scalar_lea.sflag [#allocation7], %s269
        %s271 = sand.u32 %s72, 1
        %s272 = smul.addr %s271, 128
        %s273 = scalar_lea.vmem [#allocation6], %s272
        %p274 = pneg %p85
        %p275 = pneg %p82
        %p276 = pneg %p106
        %p277 = pneg %p103
        %p278 = pneg %p127
        %p279 = pneg %p124
        %p280 = pneg %p153
        %p281 = pneg %p150
        %s282 = sand.u32 %s140, 1
        %s283 = scalar_lea.sflag [#allocation5], %s282
        %s284 = sand.u32 %s140, 1
        %s285 = smul.addr %s284, 128
        %s286 = scalar_lea.vmem [#allocation9], %s285
        %s287 = smul.u32 16, %s28
        %s288 = smul.u32 2, %s29
        %s289 = smul.u32 32, %s29
        %s290 = smul.u32 16, %s28
        %p292 = scmp.eq.s32.totalorder %s29, 0
        // Predicated region
        $region49: #{tpu_custom_call.1} parent=35 // pred_check
          %p293 = pneg %p292
        $region50: #{tpu_custom_call.1} parent=35 // pred_check_branch
          %295 = sbr.rel (%p293) target = $region52
        $region51: #{tpu_custom_call.1} parent=35 // pred_region
          %296 = vst [vmem:[#allocation2] sm:$0xff] 0.0
          %297 = vst [vmem:[#allocation2 + $0x8] sm:$0xff] 0.0
          %298 = vst [vmem:[#allocation2 + $0x10] sm:$0xff] 0.0
          %299 = vst [vmem:[#allocation2 + $0x18] sm:$0xff] 0.0
          %300 = vst [vmem:[#allocation2 + $0x20] sm:$0xff] 0.0
          %301 = vst [vmem:[#allocation2 + $0x28] sm:$0xff] 0.0
          %302 = vst [vmem:[#allocation2 + $0x30] sm:$0xff] 0.0
          %303 = vst [vmem:[#allocation2 + $0x38] sm:$0xff] 0.0
          %304 = vst [vmem:[#allocation2 + $0x40] sm:$0xff] 0.0
          %305 = vst [vmem:[#allocation2 + $0x48] sm:$0xff] 0.0
          %306 = vst [vmem:[#allocation2 + $0x50] sm:$0xff] 0.0
          %307 = vst [vmem:[#allocation2 + $0x58] sm:$0xff] 0.0
          %308 = vst [vmem:[#allocation2 + $0x60] sm:$0xff] 0.0
          %309 = vst [vmem:[#allocation2 + $0x68] sm:$0xff] 0.0
          %310 = vst [vmem:[#allocation2 + $0x70] sm:$0xff] 0.0
          %311 = vst [vmem:[#allocation2 + $0x78] sm:$0xff] 0.0
        $region52: #{tpu_custom_call.1} parent=35 // pred_fallthru
          _
        %v312 = vld [vmem:[#allocation2] sm:$0xff]
        %v313 = vld [vmem:[#allocation2 + $0x8] sm:$0xff]
        %v314 = vld [vmem:[#allocation2 + $0x10] sm:$0xff]
        %v315 = vld [vmem:[#allocation2 + $0x18] sm:$0xff]
        %v316 = vld [vmem:[#allocation2 + $0x20] sm:$0xff]
        %v317 = vld [vmem:[#allocation2 + $0x28] sm:$0xff]
        %v318 = vld [vmem:[#allocation2 + $0x30] sm:$0xff]
        %v319 = vld [vmem:[#allocation2 + $0x38] sm:$0xff]
        %v320 = vld [vmem:[#allocation2 + $0x40] sm:$0xff]
        %v321 = vld [vmem:[#allocation2 + $0x48] sm:$0xff]
        %v322 = vld [vmem:[#allocation2 + $0x50] sm:$0xff]
        %v323 = vld [vmem:[#allocation2 + $0x58] sm:$0xff]
        %v324 = vld [vmem:[#allocation2 + $0x60] sm:$0xff]
        %v325 = vld [vmem:[#allocation2 + $0x68] sm:$0xff]
        %v326 = vld [vmem:[#allocation2 + $0x70] sm:$0xff]
        %v327 = vld [vmem:[#allocation2 + $0x78] sm:$0xff]
        %v328 = vld [vmem:[%s244] sm:$0xff]
        %v329 = vld [vmem:[%s244 + $0x8] sm:$0xff]
        %v330 = vld [vmem:[%s244 + $0x10] sm:$0xff]
        %v331 = vld [vmem:[%s244 + $0x18] sm:$0xff]
        %v332 = vld [vmem:[%s244 + $0x20] sm:$0xff]
        %v333 = vld [vmem:[%s244 + $0x28] sm:$0xff]
        %v334 = vld [vmem:[%s244 + $0x30] sm:$0xff]
        %v335 = vld [vmem:[%s244 + $0x38] sm:$0xff]
        %v336 = vld [vmem:[%s244 + $0x40] sm:$0xff]
        %v337 = vld [vmem:[%s244 + $0x48] sm:$0xff]
        %v338 = vld [vmem:[%s244 + $0x50] sm:$0xff]
        %v339 = vld [vmem:[%s244 + $0x58] sm:$0xff]
        %v340 = vld [vmem:[%s244 + $0x60] sm:$0xff]
        %v341 = vld [vmem:[%s244 + $0x68] sm:$0xff]
        %v342 = vld [vmem:[%s244 + $0x70] sm:$0xff]
        %v343 = vld [vmem:[%s244 + $0x78] sm:$0xff]
        %v344 = vld [vmem:[%s253] sm:$0xf]
        %v345 = vld [vmem:[%s253 + $0x4] sm:$0xf]
        %v346 = vld [vmem:[%s253 + $0x8] sm:$0xf]
        %v347 = vld [vmem:[%s253 + $0xc] sm:$0xf]
        %v348 = vld [vmem:[%s253 + $0x10] sm:$0xf]
        %v349 = vld [vmem:[%s253 + $0x14] sm:$0xf]
        %v350 = vld [vmem:[%s253 + $0x18] sm:$0xf]
        %v351 = vld [vmem:[%s253 + $0x1c] sm:$0xf]
        %v352 = vld [vmem:[%s253 + $0x20] sm:$0xf]
        %v353 = vld [vmem:[%s253 + $0x24] sm:$0xf]
        %v354 = vld [vmem:[%s253 + $0x28] sm:$0xf]
        %v355 = vld [vmem:[%s253 + $0x2c] sm:$0xf]
        %v356 = vld [vmem:[%s253 + $0x30] sm:$0xf]
        %v357 = vld [vmem:[%s253 + $0x34] sm:$0xf]
        %v358 = vld [vmem:[%s253 + $0x38] sm:$0xf]
        %v359 = vld [vmem:[%s253 + $0x3c] sm:$0xf]
        %v360 = vld [vmem:[%s253 + $0x40] sm:$0xf]
        %v361 = vld [vmem:[%s253 + $0x44] sm:$0xf]
        %v362 = vld [vmem:[%s253 + $0x48] sm:$0xf]
        %v363 = vld [vmem:[%s253 + $0x4c] sm:$0xf]
        %v364 = vld [vmem:[%s253 + $0x50] sm:$0xf]
        %v365 = vld [vmem:[%s253 + $0x54] sm:$0xf]
        %v366 = vld [vmem:[%s253 + $0x58] sm:$0xf]
        %v367 = vld [vmem:[%s253 + $0x5c] sm:$0xf]
        %v368 = vld [vmem:[%s253 + $0x60] sm:$0xf]
        %v369 = vld [vmem:[%s253 + $0x64] sm:$0xf]
        %v370 = vld [vmem:[%s253 + $0x68] sm:$0xf]
        %v371 = vld [vmem:[%s253 + $0x6c] sm:$0xf]
        %v372 = vld [vmem:[%s253 + $0x70] sm:$0xf]
        %v373 = vld [vmem:[%s253 + $0x74] sm:$0xf]
        %v374 = vld [vmem:[%s253 + $0x78] sm:$0xf]
        %v375 = vld [vmem:[%s253 + $0x7c] sm:$0xf]
        %v392 = vunpack.c.l.b16 %v328
        %v393 = vunpack.c.h.b16 %v328
        %v394 = vunpack.c.l.b16 %v329
        %v395 = vunpack.c.h.b16 %v329
        %v396 = vunpack.c.l.b16 %v330
        %v397 = vunpack.c.h.b16 %v330
        %v398 = vunpack.c.l.b16 %v331
        %v399 = vunpack.c.h.b16 %v331
        %v400 = vunpack.c.l.b16 %v332
        %v401 = vunpack.c.h.b16 %v332
        %v402 = vunpack.c.l.b16 %v333
        %v403 = vunpack.c.h.b16 %v333
        %v404 = vunpack.c.l.b16 %v334
        %v405 = vunpack.c.h.b16 %v334
        %v406 = vunpack.c.l.b16 %v335
        %v407 = vunpack.c.h.b16 %v335
        %v408 = vunpack.c.l.b16 %v336
        %v409 = vunpack.c.h.b16 %v336
        %v410 = vunpack.c.l.b16 %v337
        %v411 = vunpack.c.h.b16 %v337
        %v412 = vunpack.c.l.b16 %v338
        %v413 = vunpack.c.h.b16 %v338
        %v414 = vunpack.c.l.b16 %v339
        %v415 = vunpack.c.h.b16 %v339
        %v416 = vunpack.c.l.b16 %v340
        %v417 = vunpack.c.h.b16 %v340
        %v418 = vunpack.c.l.b16 %v341
        %v419 = vunpack.c.h.b16 %v341
        %v420 = vunpack.c.l.b16 %v342
        %v421 = vunpack.c.h.b16 %v342
        %v422 = vunpack.c.l.b16 %v343
        %v423 = vunpack.c.h.b16 %v343
        %v424 = vpack.c.b16 %v394, %v392
        %v425 = vpack.c.b16 %v395, %v393
        %v426 = vpack.c.b16 %v398, %v396
        %v427 = vpack.c.b16 %v399, %v397
        %v428 = vpack.c.b16 %v402, %v400
        %v429 = vpack.c.b16 %v403, %v401
        %v430 = vpack.c.b16 %v406, %v404
        %v431 = vpack.c.b16 %v407, %v405
        %v432 = vpack.c.b16 %v410, %v408
        %v433 = vpack.c.b16 %v411, %v409
        %v434 = vpack.c.b16 %v414, %v412
        %v435 = vpack.c.b16 %v415, %v413
        %v436 = vpack.c.b16 %v418, %v416
        %v437 = vpack.c.b16 %v419, %v417
        %v438 = vpack.c.b16 %v422, %v420
        %v439 = vpack.c.b16 %v423, %v421
        %v488 = vunpack.c.l.b16 %v344
        %v489 = vunpack.c.l.b16 %v345
        %v490 = vunpack.c.l.b16 %v346
        %v491 = vunpack.c.l.b16 %v347
        %v492 = vunpack.c.l.b16 %v348
        %v493 = vunpack.c.l.b16 %v349
        %v494 = vunpack.c.l.b16 %v350
        %v495 = vunpack.c.l.b16 %v351
        %v496 = vunpack.c.l.b16 %v352
        %v497 = vunpack.c.l.b16 %v353
        %v498 = vunpack.c.l.b16 %v354
        %v499 = vunpack.c.l.b16 %v355
        %v500 = vunpack.c.l.b16 %v356
        %v501 = vunpack.c.l.b16 %v357
        %v502 = vunpack.c.l.b16 %v358
        %v503 = vunpack.c.l.b16 %v359
        %v504 = vunpack.c.l.b16 %v360
        %v505 = vunpack.c.l.b16 %v361
        %v506 = vunpack.c.l.b16 %v362
        %v507 = vunpack.c.l.b16 %v363
        %v508 = vunpack.c.l.b16 %v364
        %v509 = vunpack.c.l.b16 %v365
        %v510 = vunpack.c.l.b16 %v366
        %v511 = vunpack.c.l.b16 %v367
        %v512 = vunpack.c.l.b16 %v368
        %v513 = vunpack.c.l.b16 %v369
        %v514 = vunpack.c.l.b16 %v370
        %v515 = vunpack.c.l.b16 %v371
        %v516 = vunpack.c.l.b16 %v372
        %v517 = vunpack.c.l.b16 %v373
        %v518 = vunpack.c.l.b16 %v374
        %v519 = vunpack.c.l.b16 %v375
        %v520 = vpack.c.b16 %v489, %v488
        %v521 = vpack.c.b16 %v491, %v490
        %v522 = vpack.c.b16 %v493, %v492
        %v523 = vpack.c.b16 %v495, %v494
        %v524 = vpack.c.b16 %v497, %v496
        %v525 = vpack.c.b16 %v499, %v498
        %v526 = vpack.c.b16 %v501, %v500
        %v527 = vpack.c.b16 %v503, %v502
        %v528 = vpack.c.b16 %v505, %v504
        %v529 = vpack.c.b16 %v507, %v506
        %v530 = vpack.c.b16 %v509, %v508
        %v531 = vpack.c.b16 %v511, %v510
        %v532 = vpack.c.b16 %v513, %v512
        %v533 = vpack.c.b16 %v515, %v514
        %v534 = vpack.c.b16 %v517, %v516
        %v535 = vpack.c.b16 %v519, %v518
        %552 = vmatprep.subr.bf16.mxu0 0
        %553 = vmatpush1.bf16.msra.mxu0 %v527
        %554 = vmatprep.subr.bf16.mxu0 0
        %555 = vmatpush1.bf16.msra.mxu0 %v526
        %556 = vmatprep.subr.bf16.mxu0 0
        %557 = vmatpush1.bf16.msra.mxu0 %v525
        %558 = vmatprep.subr.bf16.mxu0 0
        %559 = vmatpush1.bf16.msra.mxu0 %v524
        %560 = vmatprep.subr.bf16.mxu0 0
        %561 = vmatpush1.bf16.msra.mxu0 %v523
        %562 = vmatprep.subr.bf16.mxu0 0
        %563 = vmatpush1.bf16.msra.mxu0 %v522
        %564 = vmatprep.subr.bf16.mxu0 0
        %565 = vmatpush1.bf16.msra.mxu0 %v521
        %566 = vmatprep.subr.bf16.mxu0 0
        %567 = vmatpush1.bf16.msra.mxu0 %v520
        %568 = vmatprep.subr.bf16.mxu0 0
        %569 = vmatpush2.bf16.msra.mxu0 %v535
        %570 = vmatprep.subr.bf16.mxu0 0
        %571 = vmatpush2.bf16.msra.mxu0 %v534
        %572 = vmatprep.subr.bf16.mxu0 0
        %573 = vmatpush2.bf16.msra.mxu0 %v533
        %574 = vmatprep.subr.bf16.mxu0 0
        %575 = vmatpush2.bf16.msra.mxu0 %v532
        %576 = vmatprep.subr.bf16.mxu0 0
        %577 = vmatpush2.bf16.msra.mxu0 %v531
        %578 = vmatprep.subr.bf16.mxu0 0
        %579 = vmatpush2.bf16.msra.mxu0 %v530
        %580 = vmatprep.subr.bf16.mxu0 0
        %581 = vmatpush2.bf16.msra.mxu0 %v529
        %582 = vmatprep.subr.bf16.mxu0 0
        %583 = vmatpush2.bf16.msra.mxu0 %v528
        %584 = vmatprep.mubr.bf16.mxu0 %v425
        %585 = vmatmul.mubr.bf16.gmra.mxu0 %v424
        %v586 = vpop.f32.mrf.mxu0
        %v587 = vadd.f32 0.0, %v586
        %v588 = vpop.f32.mrf.mxu0
        %v589 = vpop.f32.mrf.mxu0
        %v590 = vadd.f32 0.0, %v589
        %v591 = vpop.f32.mrf.mxu0
        %592 = vmatprep.mubr.bf16.mxu0 %v427
        %593 = vmatmul.mubr.bf16.gmra.mxu0 %v426
        %v594 = vpop.f32.mrf.mxu0
        %v595 = vadd.f32 0.0, %v594
        %v596 = vpop.f32.mrf.mxu0
        %v597 = vpop.f32.mrf.mxu0
        %v598 = vadd.f32 0.0, %v597
        %v599 = vpop.f32.mrf.mxu0
        %600 = vmatprep.mubr.bf16.mxu0 %v429
        %601 = vmatmul.mubr.bf16.gmra.mxu0 %v428
        %v602 = vpop.f32.mrf.mxu0
        %v603 = vadd.f32 0.0, %v602
        %v604 = vpop.f32.mrf.mxu0
        %v605 = vpop.f32.mrf.mxu0
        %v606 = vadd.f32 0.0, %v605
        %v607 = vpop.f32.mrf.mxu0
        %608 = vmatprep.mubr.bf16.mxu0 %v431
        %609 = vmatmul.mubr.bf16.gmra.mxu0 %v430
        %v610 = vpop.f32.mrf.mxu0
        %v611 = vadd.f32 0.0, %v610
        %v612 = vpop.f32.mrf.mxu0
        %v613 = vpop.f32.mrf.mxu0
        %v614 = vadd.f32 0.0, %v613
        %v615 = vpop.f32.mrf.mxu0
        %616 = vmatprep.mubr.bf16.mxu0 %v433
        %617 = vmatmul.mubr.bf16.gmra.mxu0 %v432
        %v618 = vpop.f32.mrf.mxu0
        %v619 = vadd.f32 0.0, %v618
        %v620 = vpop.f32.mrf.mxu0
        %v621 = vpop.f32.mrf.mxu0
        %v622 = vadd.f32 0.0, %v621
        %v623 = vpop.f32.mrf.mxu0
        %624 = vmatprep.mubr.bf16.mxu0 %v435
        %625 = vmatmul.mubr.bf16.gmra.mxu0 %v434
        %v626 = vpop.f32.mrf.mxu0
        %v627 = vadd.f32 0.0, %v626
        %v628 = vpop.f32.mrf.mxu0
        %v629 = vpop.f32.mrf.mxu0
        %v630 = vadd.f32 0.0, %v629
        %v631 = vpop.f32.mrf.mxu0
        %632 = vmatprep.mubr.bf16.mxu0 %v437
        %633 = vmatmul.mubr.bf16.gmra.mxu0 %v436
        %v634 = vpop.f32.mrf.mxu0
        %v635 = vadd.f32 0.0, %v634
        %v636 = vpop.f32.mrf.mxu0
        %v637 = vpop.f32.mrf.mxu0
        %v638 = vadd.f32 0.0, %v637
        %v639 = vpop.f32.mrf.mxu0
        %640 = vmatprep.mubr.bf16.mxu0 %v439
        %641 = vmatmul.mubr.bf16.gmra.mxu0 %v438
        %v642 = vpop.f32.mrf.mxu0
        %v643 = vadd.f32 0.0, %v642
        %v644 = vpop.f32.mrf.mxu0
        %v645 = vpop.f32.mrf.mxu0
        %v646 = vadd.f32 0.0, %v645
        %v647 = vpop.f32.mrf.mxu0
        %648 = vdwg.mxu0
        %v649 = vadd.f32 %v312, %v587
        %v650 = vadd.f32 %v313, %v590
        %v651 = vadd.f32 %v314, %v595
        %v652 = vadd.f32 %v315, %v598
        %v653 = vadd.f32 %v316, %v603
        %v654 = vadd.f32 %v317, %v606
        %v655 = vadd.f32 %v318, %v611
        %v656 = vadd.f32 %v319, %v614
        %v657 = vadd.f32 %v320, %v619
        %v658 = vadd.f32 %v321, %v622
        %v659 = vadd.f32 %v322, %v627
        %v660 = vadd.f32 %v323, %v630
        %v661 = vadd.f32 %v324, %v635
        %v662 = vadd.f32 %v325, %v638
        %v663 = vadd.f32 %v326, %v643
        %v664 = vadd.f32 %v327, %v646
        %665 = vst [vmem:[#allocation2] sm:$0xff] %v649
        %666 = vst [vmem:[#allocation2 + $0x8] sm:$0xff] %v650
        %667 = vst [vmem:[#allocation2 + $0x10] sm:$0xff] %v651
        %668 = vst [vmem:[#allocation2 + $0x18] sm:$0xff] %v652
        %669 = vst [vmem:[#allocation2 + $0x20] sm:$0xff] %v653
        %670 = vst [vmem:[#allocation2 + $0x28] sm:$0xff] %v654
        %671 = vst [vmem:[#allocation2 + $0x30] sm:$0xff] %v655
        %672 = vst [vmem:[#allocation2 + $0x38] sm:$0xff] %v656
        %673 = vst [vmem:[#allocation2 + $0x40] sm:$0xff] %v657
        %674 = vst [vmem:[#allocation2 + $0x48] sm:$0xff] %v658
        %675 = vst [vmem:[#allocation2 + $0x50] sm:$0xff] %v659
        %676 = vst [vmem:[#allocation2 + $0x58] sm:$0xff] %v660
        %677 = vst [vmem:[#allocation2 + $0x60] sm:$0xff] %v661
        %678 = vst [vmem:[#allocation2 + $0x68] sm:$0xff] %v662
        %679 = vst [vmem:[#allocation2 + $0x70] sm:$0xff] %v663
        %680 = vst [vmem:[#allocation2 + $0x78] sm:$0xff] %v664
        %p681 = scmp.eq.s32.totalorder %s29, 1
        // Predicated region
        $region53: #{tpu_custom_call.1} parent=35 // pred_check
          %p682 = pneg %p681
        $region54: #{tpu_custom_call.1} parent=35 // pred_check_branch
          %684 = sbr.rel (%p682) target = $region56
        $region55: #{tpu_custom_call.1} parent=35 // pred_region
          %v685 = vld [vmem:[#allocation2] sm:$0xff]
          %v686 = vld [vmem:[#allocation2 + $0x8] sm:$0xff]
          %v687 = vld [vmem:[#allocation2 + $0x10] sm:$0xff]
          %v688 = vld [vmem:[#allocation2 + $0x18] sm:$0xff]
          %v689 = vld [vmem:[#allocation2 + $0x20] sm:$0xff]
          %v690 = vld [vmem:[#allocation2 + $0x28] sm:$0xff]
          %v691 = vld [vmem:[#allocation2 + $0x30] sm:$0xff]
          %v692 = vld [vmem:[#allocation2 + $0x38] sm:$0xff]
          %v693 = vld [vmem:[#allocation2 + $0x40] sm:$0xff]
          %v694 = vld [vmem:[#allocation2 + $0x48] sm:$0xff]
          %v695 = vld [vmem:[#allocation2 + $0x50] sm:$0xff]
          %v696 = vld [vmem:[#allocation2 + $0x58] sm:$0xff]
          %v697 = vld [vmem:[#allocation2 + $0x60] sm:$0xff]
          %v698 = vld [vmem:[#allocation2 + $0x68] sm:$0xff]
          %v699 = vld [vmem:[#allocation2 + $0x70] sm:$0xff]
          %v700 = vld [vmem:[#allocation2 + $0x78] sm:$0xff]
          %v701 = vpack.c.bf16 %v686, %v685
          %v702 = vpack.c.bf16 %v688, %v687
          %v703 = vpack.c.bf16 %v690, %v689
          %v704 = vpack.c.bf16 %v692, %v691
          %v705 = vpack.c.bf16 %v694, %v693
          %v706 = vpack.c.bf16 %v696, %v695
          %v707 = vpack.c.bf16 %v698, %v697
          %v708 = vpack.c.bf16 %v700, %v699
          %v709 = vld [vmem:[#allocation8] sm:$0xf]
          %v710 = vld [vmem:[#allocation8 + $0x4] sm:$0xf]
          %v711 = vld [vmem:[#allocation8 + $0x8] sm:$0xf]
          %v712 = vld [vmem:[#allocation8 + $0xc] sm:$0xf]
          %v713 = vld [vmem:[#allocation8 + $0x10] sm:$0xf]
          %v714 = vld [vmem:[#allocation8 + $0x14] sm:$0xf]
          %v715 = vld [vmem:[#allocation8 + $0x18] sm:$0xf]
          %v716 = vld [vmem:[#allocation8 + $0x1c] sm:$0xf]
          %v717 = vld [vmem:[#allocation8 + $0x20] sm:$0xf]
          %v718 = vld [vmem:[#allocation8 + $0x24] sm:$0xf]
          %v719 = vld [vmem:[#allocation8 + $0x28] sm:$0xf]
          %v720 = vld [vmem:[#allocation8 + $0x2c] sm:$0xf]
          %v721 = vld [vmem:[#allocation8 + $0x30] sm:$0xf]
          %v722 = vld [vmem:[#allocation8 + $0x34] sm:$0xf]
          %v723 = vld [vmem:[#allocation8 + $0x38] sm:$0xf]
          %v724 = vld [vmem:[#allocation8 + $0x3c] sm:$0xf]
          %v725 = vld [vmem:[%s3] sm:$0x1]
          %v727 = vlaneseq
          %v728 = vshrl.u32 %v727, 7
          %v729 = vsub.s32 0, %v728
          %v730 = vrot.slane %v725, %v729
          %v748 = vunpack.c.l.b16 %v709
          %v749 = vunpack.c.l.b16 %v710
          %v750 = vunpack.c.l.b16 %v711
          %v751 = vunpack.c.l.b16 %v712
          %v752 = vunpack.c.l.b16 %v713
          %v753 = vunpack.c.l.b16 %v714
          %v754 = vunpack.c.l.b16 %v715
          %v755 = vunpack.c.l.b16 %v716
          %v756 = vunpack.c.l.b16 %v717
          %v757 = vunpack.c.l.b16 %v718
          %v758 = vunpack.c.l.b16 %v719
          %v759 = vunpack.c.l.b16 %v720
          %v760 = vunpack.c.l.b16 %v721
          %v761 = vunpack.c.l.b16 %v722
          %v762 = vunpack.c.l.b16 %v723
          %v763 = vunpack.c.l.b16 %v724
          %v764 = vpack.c.b16 %v749, %v748
          %v765 = vpack.c.b16 %v751, %v750
          %v766 = vpack.c.b16 %v753, %v752
          %v767 = vpack.c.b16 %v755, %v754
          %v768 = vpack.c.b16 %v757, %v756
          %v769 = vpack.c.b16 %v759, %v758
          %v770 = vpack.c.b16 %v761, %v760
          %v771 = vpack.c.b16 %v763, %v762
          %780 = vmatprep.subr.bf16.mxu0 0
          %781 = vmatpush1.bf16.msra.mxu0 %v771
          %782 = vmatprep.subr.bf16.mxu0 0
          %783 = vmatpush1.bf16.msra.mxu0 %v770
          %784 = vmatprep.subr.bf16.mxu0 0
          %785 = vmatpush1.bf16.msra.mxu0 %v769
          %786 = vmatprep.subr.bf16.mxu0 0
          %787 = vmatpush1.bf16.msra.mxu0 %v768
          %788 = vmatprep.subr.bf16.mxu0 0
          %789 = vmatpush1.bf16.msra.mxu0 %v767
          %790 = vmatprep.subr.bf16.mxu0 0
          %791 = vmatpush1.bf16.msra.mxu0 %v766
          %792 = vmatprep.subr.bf16.mxu0 0
          %793 = vmatpush1.bf16.msra.mxu0 %v765
          %794 = vmatprep.subr.bf16.mxu0 0
          %795 = vmatpush1.bf16.msra.mxu0 %v764
          %796 = vmatprep.subr.bf16.mxu0 0
          %797 = vmatpush2.bf16.msra.mxu0 0
          %798 = vmatprep.subr.bf16.mxu0 0
          %799 = vmatpush2.bf16.msra.mxu0 0
          %800 = vmatprep.subr.bf16.mxu0 0
          %801 = vmatpush2.bf16.msra.mxu0 0
          %802 = vmatprep.subr.bf16.mxu0 0
          %803 = vmatpush2.bf16.msra.mxu0 0
          %804 = vmatprep.subr.bf16.mxu0 0
          %805 = vmatpush2.bf16.msra.mxu0 0
          %806 = vmatprep.subr.bf16.mxu0 0
          %807 = vmatpush2.bf16.msra.mxu0 0
          %808 = vmatprep.subr.bf16.mxu0 0
          %809 = vmatpush2.bf16.msra.mxu0 0
          %810 = vmatprep.subr.bf16.mxu0 0
          %811 = vmatpush2.bf16.msra.mxu0 0
          %812 = vmatprep.mubr.bf16.mxu0 0
          %813 = vmatmul.mubr.bf16.gmra.mxu0 %v701
          %v814 = vpop.f32.mrf.mxu0
          %v815 = vadd.f32 %v730, %v814
          %v816 = vpop.f32.mrf.mxu0
          %v817 = vpop.f32.mrf.mxu0
          %v818 = vadd.f32 %v730, %v817
          %v819 = vpop.f32.mrf.mxu0
          %820 = vmatprep.mubr.bf16.mxu0 0
          %821 = vmatmul.mubr.bf16.gmra.mxu0 %v702
          %v822 = vpop.f32.mrf.mxu0
          %v823 = vadd.f32 %v730, %v822
          %v824 = vpop.f32.mrf.mxu0
          %v825 = vpop.f32.mrf.mxu0
          %v826 = vadd.f32 %v730, %v825
          %v827 = vpop.f32.mrf.mxu0
          %828 = vmatprep.mubr.bf16.mxu0 0
          %829 = vmatmul.mubr.bf16.gmra.mxu0 %v703
          %v830 = vpop.f32.mrf.mxu0
          %v831 = vadd.f32 %v730, %v830
          %v832 = vpop.f32.mrf.mxu0
          %v833 = vpop.f32.mrf.mxu0
          %v834 = vadd.f32 %v730, %v833
          %v835 = vpop.f32.mrf.mxu0
          %836 = vmatprep.mubr.bf16.mxu0 0
          %837 = vmatmul.mubr.bf16.gmra.mxu0 %v704
          %v838 = vpop.f32.mrf.mxu0
          %v839 = vadd.f32 %v730, %v838
          %v840 = vpop.f32.mrf.mxu0
          %v841 = vpop.f32.mrf.mxu0
          %v842 = vadd.f32 %v730, %v841
          %v843 = vpop.f32.mrf.mxu0
          %844 = vmatprep.mubr.bf16.mxu0 0
          %845 = vmatmul.mubr.bf16.gmra.mxu0 %v705
          %v846 = vpop.f32.mrf.mxu0
          %v847 = vadd.f32 %v730, %v846
          %v848 = vpop.f32.mrf.mxu0
          %v849 = vpop.f32.mrf.mxu0
          %v850 = vadd.f32 %v730, %v849
          %v851 = vpop.f32.mrf.mxu0
          %852 = vmatprep.mubr.bf16.mxu0 0
          %853 = vmatmul.mubr.bf16.gmra.mxu0 %v706
          %v854 = vpop.f32.mrf.mxu0
          %v855 = vadd.f32 %v730, %v854
          %v856 = vpop.f32.mrf.mxu0
          %v857 = vpop.f32.mrf.mxu0
          %v858 = vadd.f32 %v730, %v857
          %v859 = vpop.f32.mrf.mxu0
          %860 = vmatprep.mubr.bf16.mxu0 0
          %861 = vmatmul.mubr.bf16.gmra.mxu0 %v707
          %v862 = vpop.f32.mrf.mxu0
          %v863 = vadd.f32 %v730, %v862
          %v864 = vpop.f32.mrf.mxu0
          %v865 = vpop.f32.mrf.mxu0
          %v866 = vadd.f32 %v730, %v865
          %v867 = vpop.f32.mrf.mxu0
          %868 = vmatprep.mubr.bf16.mxu0 0
          %869 = vmatmul.mubr.bf16.gmra.mxu0 %v708
          %v870 = vpop.f32.mrf.mxu0
          %v871 = vadd.f32 %v730, %v870
          %v872 = vpop.f32.mrf.mxu0
          %v873 = vpop.f32.mrf.mxu0
          %v874 = vadd.f32 %v730, %v873
          %v875 = vpop.f32.mrf.mxu0
          %876 = vdwg.mxu0
          %877 = vst [vmem:[%s286] sm:$0xff] %v815
          %878 = vst [vmem:[%s286 + $0x8] sm:$0xff] %v818
          %879 = vst [vmem:[%s286 + $0x10] sm:$0xff] %v823
          %880 = vst [vmem:[%s286 + $0x18] sm:$0xff] %v826
          %881 = vst [vmem:[%s286 + $0x20] sm:$0xff] %v831
          %882 = vst [vmem:[%s286 + $0x28] sm:$0xff] %v834
          %883 = vst [vmem:[%s286 + $0x30] sm:$0xff] %v839
          %884 = vst [vmem:[%s286 + $0x38] sm:$0xff] %v842
          %885 = vst [vmem:[%s286 + $0x40] sm:$0xff] %v847
          %886 = vst [vmem:[%s286 + $0x48] sm:$0xff] %v850
          %887 = vst [vmem:[%s286 + $0x50] sm:$0xff] %v855
          %888 = vst [vmem:[%s286 + $0x58] sm:$0xff] %v858
          %889 = vst [vmem:[%s286 + $0x60] sm:$0xff] %v863
          %890 = vst [vmem:[%s286 + $0x68] sm:$0xff] %v866
          %891 = vst [vmem:[%s286 + $0x70] sm:$0xff] %v871
          %892 = vst [vmem:[%s286 + $0x78] sm:$0xff] %v874
        $region56: #{tpu_custom_call.1} parent=35 // pred_fallthru
          _
        %s893 = sand.u32 %s140, 1
        %s894 = scalar_lea.sflag [#allocation5], %s893
        %s895 = sand.u32 %s140, 1
        %s896 = smul.addr %s895, 128
        %s897 = scalar_lea.vmem [#allocation9], %s896
        // Predicated region
        $region57: #{tpu_custom_call.1} parent=35 // pred_check
          %p898 = pneg %p150
        $region58: #{tpu_custom_call.1} parent=35 // pred_check_branch
          %900 = sbr.rel (%p898) target = $region60
        $region59: #{tpu_custom_call.1} parent=35 // pred_region
          %s901 = smul.u32 16, %s28
          %s903 = ssub.s32 2048, 2048
          %904 = vsyncadd %s894, %s903
          %s905 = smul.addr %s901, 128
          %s906 = scalar_lea.hbm %s4, %s905
          %s907 = sshll.u32 %s897, 4
          %s908 = int_to_ptr.vmem [resolvable:$true] %s907
          %913 = dma.vmem_to_hbm [thread:$0]  %s908, 2048, %s906, %s894, 128, 128, 8
        $region60: #{tpu_custom_call.1} parent=35 // pred_fallthru
          _
      $region36: #{tpu_custom_call.1} parent=5 // pred_fallthru
        _
      %p914 = scmp.le.s32.totalorder 2, %s19
      // Predicated region
      $region61: #{tpu_custom_call.1} parent=5 // pred_check
        %p915 = pneg %p914
      $region62: #{tpu_custom_call.1} parent=5 // pred_check_branch
        %917 = sbr.rel (%p915) target = $region64
      $region63: #{tpu_custom_call.1} parent=5 // pred_region
        %s918 = ssub.s32 %s19, 2
        // Predicated region
        $region65: #{tpu_custom_call.1} parent=63 // pred_check
          %p919 = pneg %p156
        $region66: #{tpu_custom_call.1} parent=63 // pred_check_branch
          %921 = sbr.rel (%p919) target = $region68
        $region67: #{tpu_custom_call.1} parent=63 // pred_region
          %s922 = sand.u32 %s141, 1
          %s923 = scalar_lea.sflag [#allocation5], %s922
          %s924 = sand.u32 %s141, 1
          %s925 = smul.addr %s924, 128
          %s926 = scalar_lea.vmem [#allocation9], %s925
          %927 = dma.done %s923, 2048
        $region68: #{tpu_custom_call.1} parent=63 // pred_fallthru
          _
      $region64: #{tpu_custom_call.1} parent=5 // pred_fallthru
        _
    $region6: #{tpu_custom_call.1} parent=1 // loop_footer
      %s23 = sadd.s32 1, %s19
    $region7: #{tpu_custom_call.1} parent=1 // loop_footer_branch
      %18 = sbr.rel target = $region3
    $region8: #{tpu_custom_call.1} parent=1 // loop_exit
      _
    %928 = vsyncpa [#allocation4], 1
    %s929 = scalar_lea.sflag [#allocation4], 1
    %930 = vsyncpa %s929, 1
    %931 = vsyncpa [#allocation7], 1
    %s932 = scalar_lea.sflag [#allocation7], 1
    %933 = vsyncpa %s932, 1
    %934 = vsyncpa [#allocation5], 1
    %s935 = scalar_lea.sflag [#allocation5], 1
    %936 = vsyncpa %s935, 1

</llo_original>
